<compile_context>
chip_gen: v7x
topology: tpu7x:2x2x1
jax: 0.10.0
libtpu: 0.0.40
codegen_flags: <defaults>
</compile_context>

<pallas_src>
import math

import jax
import jax.numpy as jnp
from jax.experimental import pallas as pl
from jax.experimental.pallas import tpu as pltpu  # noqa: F401  (kept for TPU backend)


# ----------------------------------------------------------------------------------
# Pallas kernel: fused lateral convs + FPN add + conv1_1 + global pool + MIL head
# ----------------------------------------------------------------------------------

def _fpn_mil_kernel(g_ref, wcat_ref, c11_w_ref, c11_b_ref,
                    fc1_w_ref, fc1_b_ref, a1_w_ref, a1_b_ref,
                    a2_w_ref, a2_b_ref, fc2_w_ref, fc2_b_ref, o_ref):
    # g:    (N, 960)  bf16  -- concat of globally-pooled backbone features [f4,f3,f2,f1]
    # wcat: (960, 512) bf16 -- stacked [lat4; lat3; lat2; lat1] 1x1-conv weights
    # All big matmuls are bf16 inputs with f32 accumulation (MXU-native rate).

    # lateral_conv_1..4 + FPN sum, applied to the pooled features (exact reorder).
    fused = jnp.dot(g_ref[...], wcat_ref[...],
                    preferred_element_type=jnp.float32)                    # (N, 512)

    # conv1_1 (1x1 conv + bias), applied after the linear global pool (exact reorder).
    g = (jnp.dot(fused.astype(jnp.bfloat16), c11_w_ref[...],
                 preferred_element_type=jnp.float32) + c11_b_ref[...])     # (N, 512)

    # fc1_1: Linear(512, 256) + ReLU
    h = jnp.maximum(
        jnp.dot(g.astype(jnp.bfloat16), fc1_w_ref[...],
                preferred_element_type=jnp.float32) + fc1_b_ref[...], 0.0)  # (N, 256)

    # attention1: Linear(256,128) + Tanh + Linear(128,1)   (tiny -> f32 throughout)
    a = jnp.tanh(
        jnp.dot(h, a1_w_ref[...], preferred_element_type=jnp.float32)
        + a1_b_ref[...])                                                    # (N, 128)
    score = jnp.sum(a * a2_w_ref[...], axis=1, keepdims=True) + a2_b_ref[...]  # (N, 1)

    # transpose + Softmax(dim=1)  == softmax over the N bag instances
    score = score - jnp.max(score, axis=0, keepdims=True)
    e = jnp.exp(score)
    wgt = e / jnp.sum(e, axis=0, keepdims=True)                             # (N, 1)

    # m = a_softmax @ x  (attention-weighted mean of the instance embeddings)
    m = jnp.sum(wgt * h, axis=0, keepdims=True)                             # (1, 256)

    # fc2_1: Linear(256, K)
    o_ref[...] = (jnp.dot(m, fc2_w_ref[...], preferred_element_type=jnp.float32)
                  + fc2_b_ref[...])                                         # (1, K)


# ----------------------------------------------------------------------------------
# Pallas wrapper
# ----------------------------------------------------------------------------------

def fpn_mil_tail_pallas(f1, f2, f3, f4, tail):
    """Fused FPN tail + MIL attention head.  One gridless pallas_call (<2 MiB VMEM).

    f1..f4 are the NCHW backbone stage outputs; `tail` holds pre-transposed /
    pre-cast (bf16) tail weights (see prepare_tail_params).
    """
    # Exactness of the pooled reorder needs equal-size 7x7 adaptive-pool bins,
    # i.e. the module's standard 224x224 input (layer4 output must be 7x7).
    # TODO(synk): uneven adaptive-pool bins (non-224 inputs) not implemented.
    assert f4.shape[2:] == (7, 7) and f1.shape[2] % 7 == 0 and f1.shape[3] % 7 == 0

    k = tail["fc2_w"].shape[1]
    # Global average pools in NCHW (plain XLA minor-dim reductions; no layout change
    # of any feature map).  Only the tiny (N, C) results are handed to Pallas.
    g4 = jnp.mean(f4, axis=(2, 3))                                # (N, 512)
    g3 = jnp.mean(f3, axis=(2, 3))                                # (N, 256)
    g2 = jnp.mean(f2, axis=(2, 3))                                # (N, 128)
    g1 = jnp.mean(f1, axis=(2, 3))                                # (N, 64)
    gcat = jnp.concatenate([g4, g3, g2, g1], axis=1).astype(jnp.bfloat16)  # (N, 960)

    return pl.pallas_call(
        _fpn_mil_kernel,
        out_shape=jax.ShapeDtypeStruct((1, k), jnp.float32),
    )(gcat, tail["wcat"], tail["c11_w"], tail["c11_b"],
      tail["fc1_w"], tail["fc1_b"], tail["att1_w"], tail["att1_b"],
      tail["att2_w"], tail["att2_b"], tail["fc2_w"], tail["fc2_b"])


def prepare_tail_params(p):
    """Pre-transpose and pre-cast the tail weights ONCE (outside jit / per forward)."""
    def t(w_oihw):  # (O, I, 1, 1) -> (I, O)
        return w_oihw.reshape(w_oihw.shape[0], w_oihw.shape[1]).T

    # Stacked lateral weights, row order must match the gcat concat order [f4,f3,f2,f1].
    wcat = jnp.concatenate([t(p["lat4"]), t(p["lat3"]), t(p["lat2"]), t(p["lat1"])],
                           axis=0)                                 # (960, 512)
    return dict(
        wcat=wcat.astype(jnp.bfloat16),
        c11_w=t(p["c11_w"]).astype(jnp.bfloat16),                  # (512, 512)
        c11_b=p["c11_b"],                                          # (1, 512) f32
        fc1_w=p["fc1_w"].astype(jnp.bfloat16),                     # (512, 256)
        fc1_b=p["fc1_b"],
        att1_w=p["att1_w"], att1_b=p["att1_b"],                    # small head: f32
        att2_w=p["att2_w"], att2_b=p["att2_b"],
        fc2_w=p["fc2_w"], fc2_b=p["fc2_b"],
    )


# ----------------------------------------------------------------------------------
# Literal f32 reference of the module tail (used only for the runtime check)
# ----------------------------------------------------------------------------------

def _adaptive_pool_7(x):
    n, c, h, w = x.shape
    return jnp.mean(x.reshape(n, c, 7, h // 7, 7, w // 7), axis=(3, 5))


def fpn_mil_tail_reference(f1, f2, f3, f4, p):
    def conv1x1(x, w):      # bias-free 1x1 conv in NCHW
        return jnp.einsum("nchw,oc->nohw", x, w.reshape(w.shape[0], w.shape[1]))

    x1 = _adaptive_pool_7(conv1x1(f1, p["lat1"]))
    x2 = _adaptive_pool_7(conv1x1(f2, p["lat2"]))
    x3 = _adaptive_pool_7(conv1x1(f3, p["lat3"]))
    x4 = conv1x1(f4, p["lat4"])
    s = x4 + x3 + x2 + x1
    c = conv1x1(s, p["c11_w"]) + p["c11_b"].reshape(1, 512, 1, 1)
    g = jnp.mean(c, axis=(2, 3))                                   # (N, 512)
    h = jax.nn.relu(g @ p["fc1_w"] + p["fc1_b"])                   # (N, 256)
    a = jnp.tanh(h @ p["att1_w"] + p["att1_b"])                    # (N, 128)
    score = jnp.sum(a * p["att2_w"], axis=1, keepdims=True) + p["att2_b"]  # (N, 1)
    wgt = jax.nn.softmax(score.T, axis=1)                          # (1, N)
    m = wgt @ h                                                    # (1, 256)
    return m @ p["fc2_w"] + p["fc2_b"]                             # (1, K)


# ----------------------------------------------------------------------------------
# ResNet18-style backbone (the injected `model` dependency) -- plain JAX glue
# ----------------------------------------------------------------------------------

def _conv2d(x, w, stride, padding):
    return jax.lax.conv_general_dilated(
        x, w, (stride, stride), ((padding, padding), (padding, padding)),
        dimension_numbers=("NCHW", "OIHW", "NCHW"))


def _batchnorm(x, p, eps=1e-5):
    g = p["gamma"].reshape(1, -1, 1, 1)
    b = p["beta"].reshape(1, -1, 1, 1)
    m = p["mean"].reshape(1, -1, 1, 1)
    v = p["var"].reshape(1, -1, 1, 1)
    return (x - m) * g * jax.lax.rsqrt(v + eps) + b


def _maxpool_3x3_s2(x):
    return jax.lax.reduce_window(
        x, -jnp.inf, jax.lax.max, (1, 1, 3, 3), (1, 1, 2, 2),
        ((0, 0), (0, 0), (1, 1), (1, 1)))


def _basic_block(x, p, stride):
    out = jax.nn.relu(_batchnorm(_conv2d(x, p["conv1"], stride, 1), p["bn1"]))
    out = _batchnorm(_conv2d(out, p["conv2"], 1, 1), p["bn2"])
    shortcut = x
    if "down" in p:
        shortcut = _batchnorm(_conv2d(x, p["down"], stride, 0), p["bn_down"])
    return jax.nn.relu(out + shortcut)


def _layer(x, blocks, stride):
    for i, blk in enumerate(blocks):
        x = _basic_block(x, blk, stride if i == 0 else 1)
    return x


def backbone_forward(x, p):
    x = x[0]                                                       # squeeze(0)
    x = jax.nn.relu(_batchnorm(_conv2d(x, p["conv1"], 2, 3), p["bn1"]))
    x = _maxpool_3x3_s2(x)
    f1 = _layer(x, p["layer1"], 1)                                 # (N, 64, 56, 56)
    f2 = _layer(f1, p["layer2"], 2)                                # (N, 128, 28, 28)
    f3 = _layer(f2, p["layer3"], 2)                                # (N, 256, 14, 14)
    f4 = _layer(f3, p["layer4"], 2)                                # (N, 512, 7, 7)
    return f1, f2, f3, f4


# ----------------------------------------------------------------------------------
# Parameter initialization (deterministic, synthetic)
# ----------------------------------------------------------------------------------

def init_params(key, num_classes):
    keys = iter(jax.random.split(key, 128))

    def kconv(out_c, in_c, k):  # kaiming_normal_ fan_out / relu
        std = math.sqrt(2.0 / (out_c * k * k))
        return std * jax.random.normal(next(keys), (out_c, in_c, k, k), jnp.float32)

    def bn(c):
        return dict(gamma=jnp.ones((c,), jnp.float32), beta=jnp.zeros((c,), jnp.float32),
                    mean=jnp.zeros((c,), jnp.float32), var=jnp.ones((c,), jnp.float32))

    def block(in_c, out_c, stride):
        p = dict(conv1=kconv(out_c, in_c, 3), bn1=bn(out_c),
                 conv2=kconv(out_c, out_c, 3), bn2=bn(out_c))
        if stride != 1 or in_c != out_c:
            p["down"] = kconv(out_c, in_c, 1)
            p["bn_down"] = bn(out_c)
        return p

    def layer(in_c, out_c, stride):
        return [block(in_c, out_c, stride), block(out_c, out_c, 1)]

    def linear(in_f, out_f):  # stored as (in, out) so kernels compute x @ W
        bound = 1.0 / math.sqrt(in_f)
        w = jax.random.uniform(next(keys), (in_f, out_f), jnp.float32, -bound, bound)
        b = jax.random.uniform(next(keys), (1, out_f), jnp.float32, -bound, bound)
        return w, b

    p = dict(
        conv1=kconv(64, 3, 7), bn1=bn(64),
        layer1=layer(64, 64, 1), layer2=layer(64, 128, 2),
        layer3=layer(128, 256, 2), layer4=layer(256, 512, 2),
        lat1=kconv(512, 64, 1), lat2=kconv(512, 128, 1),
        lat3=kconv(512, 256, 1), lat4=kconv(512, 512, 1),
        c11_w=kconv(512, 512, 1),
        c11_b=jax.random.uniform(next(keys), (1, 512), jnp.float32,
                                 -1.0 / math.sqrt(512), 1.0 / math.sqrt(512)),
    )
    p["fc1_w"], p["fc1_b"] = linear(512, 256)
    p["att1_w"], p["att1_b"] = linear(256, 128)
    aw2, ab2 = linear(128, 1)
    p["att2_w"], p["att2_b"] = aw2.T, ab2            # (1, 128), (1, 1)
    p["fc2_w"], p["fc2_b"] = linear(256, num_classes)
    return p


# ----------------------------------------------------------------------------------
# ResnetAttention forward
# ----------------------------------------------------------------------------------

def resnet_attention_forward(x, p, tail):
    """Production entry point: XLA backbone + single fused Pallas FPN/MIL tail."""
    f1, f2, f3, f4 = backbone_forward(x, p)
    return fpn_mil_tail_pallas(f1, f2, f3, f4, tail)               # (1, K)


def _forward_and_reference(x, p, tail):
    """Same as resnet_attention_forward, plus the literal f32 module-tail path
    (shares one backbone evaluation; used to verify the fused kernel)."""
    feats = backbone_forward(x, p)
    return fpn_mil_tail_pallas(*feats, tail), fpn_mil_tail_reference(*feats, p)


# ----------------------------------------------------------------------------------

if __name__ == "__main__":
    num_classes = 3
    key = jax.random.PRNGKey(0)
    kx, kp = jax.random.split(key)

    # Input matches the module's expectation: a (1, bag, 3, 224, 224) bag of images;
    # 224 is required so layer4 emits 7x7 and the adaptive-pool bins are equal-sized.
    x = jax.random.normal(kx, (1, 2, 3, 224, 224), jnp.float32)
    params = init_params(kp, num_classes)
    tail = prepare_tail_params(params)   # pre-transpose / pre-cast weights ONCE

    run = jax.jit(_forward_and_reference)
    out, ref = jax.block_until_ready(run(x, params, tail))

    assert out.shape == (1, num_classes), out.shape
    assert bool(jnp.all(jnp.isfinite(out)))

    # Fused bf16 Pallas tail vs literal f32 module path (same backbone features).
    rel_err = float(jnp.max(jnp.abs(out - ref)) / (jnp.max(jnp.abs(ref)) + 1e-6))
    assert rel_err < 0.15, f"mismatch vs f32 reference: rel_err={rel_err}"

    print("KERNEL_OK")
</pallas_src>

<mosaic_0001>
module attributes {stable_mosaic.version = 11 : i64} {
  func.func @_fpn_mil_kernel(%arg0: memref<2x960xbf16, #tpu.memory_space<vmem>>, %arg1: memref<960x512xbf16, #tpu.memory_space<vmem>>, %arg2: memref<512x512xbf16, #tpu.memory_space<vmem>>, %arg3: memref<1x512xf32, #tpu.memory_space<vmem>>, %arg4: memref<512x256xbf16, #tpu.memory_space<vmem>>, %arg5: memref<1x256xf32, #tpu.memory_space<vmem>>, %arg6: memref<256x128xf32, #tpu.memory_space<vmem>>, %arg7: memref<1x128xf32, #tpu.memory_space<vmem>>, %arg8: memref<1x128xf32, #tpu.memory_space<vmem>>, %arg9: memref<1x1xf32, #tpu.memory_space<vmem>>, %arg10: memref<256x3xf32, #tpu.memory_space<vmem>>, %arg11: memref<1x3xf32, #tpu.memory_space<vmem>>, %arg12: memref<1x3xf32, #tpu.memory_space<vmem>>) attributes {dimension_semantics = [], scalar_prefetch = 0 : i64, scratch_operands = 0 : i64, tpu.core_type = #tpu.core_type<tc>} {
    %c0 = arith.constant 0 : index
    %c0_0 = arith.constant 0 : index
    %0 = vector.load %arg0[%c0, %c0_0] : memref<2x960xbf16, #tpu.memory_space<vmem>>, vector<2x960xbf16>
    %c0_1 = arith.constant 0 : index
    %c0_2 = arith.constant 0 : index
    %1 = vector.load %arg1[%c0_1, %c0_2] : memref<960x512xbf16, #tpu.memory_space<vmem>>, vector<960x512xbf16>
    %cst = arith.constant dense<0.000000e+00> : vector<2x512xf32>
    %2 = tpu.matmul %0, %1, %cst {dimension_numbers = #tpu.dot_dimension_numbers<[1], [0], [0], [1], [0, 0, 1, 1], [], []>} : vector<2x960xbf16>, vector<960x512xbf16>, vector<2x512xf32> -> vector<2x512xf32>
    %3 = arith.truncf %2 : vector<2x512xf32> to vector<2x512xbf16>
    %c0_3 = arith.constant 0 : index
    %c0_4 = arith.constant 0 : index
    %4 = vector.load %arg2[%c0_3, %c0_4] : memref<512x512xbf16, #tpu.memory_space<vmem>>, vector<512x512xbf16>
    %cst_5 = arith.constant dense<0.000000e+00> : vector<2x512xf32>
    %5 = tpu.matmul %3, %4, %cst_5 {dimension_numbers = #tpu.dot_dimension_numbers<[1], [0], [0], [1], [0, 0, 1, 1], [], []>} : vector<2x512xbf16>, vector<512x512xbf16>, vector<2x512xf32> -> vector<2x512xf32>
    %c0_6 = arith.constant 0 : index
    %c0_7 = arith.constant 0 : index
    %6 = vector.load %arg3[%c0_6, %c0_7] : memref<1x512xf32, #tpu.memory_space<vmem>>, vector<1x512xf32>
    %7 = vector.broadcast %6 : vector<1x512xf32> to vector<2x512xf32>
    %8 = arith.addf %5, %7 : vector<2x512xf32>
    %9 = arith.truncf %8 : vector<2x512xf32> to vector<2x512xbf16>
    %c0_8 = arith.constant 0 : index
    %c0_9 = arith.constant 0 : index
    %10 = vector.load %arg4[%c0_8, %c0_9] : memref<512x256xbf16, #tpu.memory_space<vmem>>, vector<512x256xbf16>
    %cst_10 = arith.constant dense<0.000000e+00> : vector<2x256xf32>
    %11 = tpu.matmul %9, %10, %cst_10 {dimension_numbers = #tpu.dot_dimension_numbers<[1], [0], [0], [1], [0, 0, 1, 1], [], []>} : vector<2x512xbf16>, vector<512x256xbf16>, vector<2x256xf32> -> vector<2x256xf32>
    %c0_11 = arith.constant 0 : index
    %c0_12 = arith.constant 0 : index
    %12 = vector.load %arg5[%c0_11, %c0_12] : memref<1x256xf32, #tpu.memory_space<vmem>>, vector<1x256xf32>
    %13 = vector.broadcast %12 : vector<1x256xf32> to vector<2x256xf32>
    %14 = arith.addf %11, %13 : vector<2x256xf32>
    %cst_13 = arith.constant 0.000000e+00 : f32
    %15 = vector.broadcast %cst_13 : f32 to vector<2x256xf32>
    %16 = arith.maximumf %14, %15 : vector<2x256xf32>
    %c0_14 = arith.constant 0 : index
    %c0_15 = arith.constant 0 : index
    %17 = vector.load %arg6[%c0_14, %c0_15] : memref<256x128xf32, #tpu.memory_space<vmem>>, vector<256x128xf32>
    %cst_16 = arith.constant dense<0.000000e+00> : vector<2x128xf32>
    %18 = tpu.matmul %16, %17, %cst_16 {dimension_numbers = #tpu.dot_dimension_numbers<[1], [0], [0], [1], [0, 0, 1, 1], [], []>} : vector<2x256xf32>, vector<256x128xf32>, vector<2x128xf32> -> vector<2x128xf32>
    %c0_17 = arith.constant 0 : index
    %c0_18 = arith.constant 0 : index
    %19 = vector.load %arg7[%c0_17, %c0_18] : memref<1x128xf32, #tpu.memory_space<vmem>>, vector<1x128xf32>
    %20 = vector.broadcast %19 : vector<1x128xf32> to vector<2x128xf32>
    %21 = arith.addf %18, %20 : vector<2x128xf32>
    %22 = math.tanh %21 : vector<2x128xf32>
    %c0_19 = arith.constant 0 : index
    %c0_20 = arith.constant 0 : index
    %23 = vector.load %arg8[%c0_19, %c0_20] : memref<1x128xf32, #tpu.memory_space<vmem>>, vector<1x128xf32>
    %24 = vector.broadcast %23 : vector<1x128xf32> to vector<2x128xf32>
    %25 = arith.mulf %22, %24 : vector<2x128xf32>
    %cst_21 = arith.constant dense<0.000000e+00> : vector<2xf32>
    %26 = vector.multi_reduction <add>, %25, %cst_21 [1] : vector<2x128xf32> to vector<2xf32>
    %27 = vector.shape_cast %26 : vector<2xf32> to vector<2x1xf32>
    %c0_22 = arith.constant 0 : index
    %c0_23 = arith.constant 0 : index
    %28 = vector.load %arg9[%c0_22, %c0_23] : memref<1x1xf32, #tpu.memory_space<vmem>>, vector<1x1xf32>
    %29 = vector.broadcast %28 : vector<1x1xf32> to vector<2x1xf32>
    %30 = arith.addf %27, %29 : vector<2x1xf32>
    %cst_24 = arith.constant dense<0xFF800000> : vector<1xf32>
    %31 = vector.multi_reduction <maximumf>, %30, %cst_24 [0] : vector<2x1xf32> to vector<1xf32>
    %32 = vector.shape_cast %31 : vector<1xf32> to vector<1x1xf32>
    %33 = vector.broadcast %32 : vector<1x1xf32> to vector<2x1xf32>
    %34 = arith.subf %30, %33 : vector<2x1xf32>
    %35 = math.exp %34 : vector<2x1xf32>
    %cst_25 = arith.constant dense<0.000000e+00> : vector<1xf32>
    %36 = vector.multi_reduction <add>, %35, %cst_25 [0] : vector<2x1xf32> to vector<1xf32>
    %37 = vector.shape_cast %36 : vector<1xf32> to vector<1x1xf32>
    %38 = vector.broadcast %37 : vector<1x1xf32> to vector<2x1xf32>
    %39 = arith.divf %35, %38 : vector<2x1xf32>
    %40 = vector.broadcast %39 : vector<2x1xf32> to vector<2x256xf32>
    %41 = arith.mulf %40, %16 : vector<2x256xf32>
    %cst_26 = arith.constant dense<0.000000e+00> : vector<256xf32>
    %42 = vector.multi_reduction <add>, %41, %cst_26 [0] : vector<2x256xf32> to vector<256xf32>
    %43 = vector.shape_cast %42 : vector<256xf32> to vector<1x256xf32>
    %c0_27 = arith.constant 0 : index
    %c0_28 = arith.constant 0 : index
    %44 = vector.load %arg10[%c0_27, %c0_28] : memref<256x3xf32, #tpu.memory_space<vmem>>, vector<256x3xf32>
    %cst_29 = arith.constant dense<0.000000e+00> : vector<1x3xf32>
    %45 = tpu.matmul %43, %44, %cst_29 {dimension_numbers = #tpu.dot_dimension_numbers<[1], [0], [0], [1], [0, 0, 1, 1], [], []>} : vector<1x256xf32>, vector<256x3xf32>, vector<1x3xf32> -> vector<1x3xf32>
    %c0_30 = arith.constant 0 : index
    %c0_31 = arith.constant 0 : index
    %46 = vector.load %arg11[%c0_30, %c0_31] : memref<1x3xf32, #tpu.memory_space<vmem>>, vector<1x3xf32>
    %47 = arith.addf %45, %46 : vector<1x3xf32>
    %c0_32 = arith.constant 0 : index
    %c0_33 = arith.constant 0 : index
    %48 = vector.load %arg12[%c0_32, %c0_33] : memref<1x3xf32, #tpu.memory_space<vmem>>, vector<1x3xf32>
    tpu.vector_store %arg12[%c0_32, %c0_33], %47 {strides = array<i32>} : memref<1x3xf32, #tpu.memory_space<vmem>>, vector<1x3xf32>,
    return
  }
}

</mosaic_0001>

<llo_original>
// kernel: _forward_and_reference.1
$region0: #{_forward_and_reference.1}
  #allocation0 [shape = 'u32[]', space=smem, size = 0x4, offset = 0x4, fixed_abs, tag = 'smem constant byte address 0x4 - core index']
  #allocation1 [shape = 'u32[144,128]{1,0:T(1,128)}', space=vmem, size = 0x12000, scoped, tag = 'internal scratch']
  #allocation2 [shape = 'f32[1,1]{1,0:T(1,128)S(1)}', space=vmem, size = 0x200, scoped, tag = 'scoped memory for _forward_and_reference.1']
  %s0 = inlined_call_operand.vmem [shape: bf16[2,960], index: 0, kind: input, shape index: {}]
  %s1 = inlined_call_operand.vmem [shape: bf16[960,512], index: 1, kind: input, shape index: {}]
  %s2 = inlined_call_operand.vmem [shape: bf16[512,512], index: 2, kind: input, shape index: {}]
  %s3 = inlined_call_operand.vmem [shape: f32[1,512], index: 3, kind: input, shape index: {}]
  %s4 = inlined_call_operand.vmem [shape: bf16[512,256], index: 4, kind: input, shape index: {}]
  %s5 = inlined_call_operand.vmem [shape: f32[1,256], index: 5, kind: input, shape index: {}]
  %s6 = inlined_call_operand.vmem [shape: f32[256,128], index: 6, kind: input, shape index: {}]
  %s7 = inlined_call_operand.vmem [shape: f32[1,128], index: 7, kind: input, shape index: {}]
  %s8 = inlined_call_operand.vmem [shape: f32[1,128], index: 8, kind: input, shape index: {}]
  %s9 = inlined_call_operand.<no memory space> [shape: f32[1,1], index: 9, kind: input, shape index: {}]
  %s10 = inlined_call_operand.vmem [shape: f32[256,3], index: 10, kind: input, shape index: {}]
  %s11 = inlined_call_operand.vmem [shape: f32[1,3], index: 11, kind: input, shape index: {}]
  %s12 = inlined_call_operand.hbm [shape: f32[1,3], index: 12, kind: output, shape index: {}]
  %s13 = sld [smem:[#allocation0]]
  $region58: #{_forward_and_reference.1} parent=0
    _
  %s15 = ssub.s32 1, %s13
  %s16 = scalar_select 0, %s15, %s13
  %v17 = vstv %s9
  %18 = vst [vmem:[#allocation2] sm:$0x1] %v17
  $region1: #{_forward_and_reference.1} parent=0
    #allocation3 [shape = 'u8[512]{0}', space=vmem, size = 0x400, scoped, tag = 'output window, operand 0, single buffered']
    #allocation4 [shape = 's32[1]{0}', space=sflag, size = 0x4, scoped, tag = 'scoped memory for _forward_and_reference.1']
    %19 = vsyncpa [#allocation4], 0
    // Predicated region
    $region2: #{_forward_and_reference.1} parent=1 // pred_check
      _
    $region3: #{_forward_and_reference.1} parent=1 // pred_check_branch
      %21 = sbr.rel (0) target = $region5
    $region4: #{_forward_and_reference.1} parent=1 // pred_region
      _
    $region5: #{_forward_and_reference.1} parent=1 // pred_fallthru
      _
    // Predicated region
    $region6: #{_forward_and_reference.1} parent=1 // pred_check
      _
    $region7: #{_forward_and_reference.1} parent=1 // pred_check_branch
      %23 = sbr.rel (0) target = $region9
    $region8: #{_forward_and_reference.1} parent=1 // pred_region
      _
    $region9: #{_forward_and_reference.1} parent=1 // pred_fallthru
      _
    // Predicated region
    $region10: #{_forward_and_reference.1} parent=1 // pred_check
      _
    $region11: #{_forward_and_reference.1} parent=1 // pred_check_branch
      %25 = sbr.rel (0) target = $region13
    $region12: #{_forward_and_reference.1} parent=1 // pred_region
      _
    $region13: #{_forward_and_reference.1} parent=1 // pred_fallthru
      _
    // Predicated region
    $region14: #{_forward_and_reference.1} parent=1 // pred_check
      _
    $region15: #{_forward_and_reference.1} parent=1 // pred_check_branch
      %27 = sbr.rel (0) target = $region17
    $region16: #{_forward_and_reference.1} parent=1 // pred_region
      _
    $region17: #{_forward_and_reference.1} parent=1 // pred_fallthru
      _
    // Predicated region
    $region18: #{_forward_and_reference.1} parent=1 // pred_check
      _
    $region19: #{_forward_and_reference.1} parent=1 // pred_check_branch
      %29 = sbr.rel (0) target = $region21
    $region20: #{_forward_and_reference.1} parent=1 // pred_region
      _
    $region21: #{_forward_and_reference.1} parent=1 // pred_fallthru
      _
    // Predicated region
    $region22: #{_forward_and_reference.1} parent=1 // pred_check
      _
    $region23: #{_forward_and_reference.1} parent=1 // pred_check_branch
      %31 = sbr.rel (0) target = $region25
    $region24: #{_forward_and_reference.1} parent=1 // pred_region
      _
    $region25: #{_forward_and_reference.1} parent=1 // pred_fallthru
      _
    // Predicated region
    $region26: #{_forward_and_reference.1} parent=1 // pred_check
      _
    $region27: #{_forward_and_reference.1} parent=1 // pred_check_branch
      %33 = sbr.rel (0) target = $region29
    $region28: #{_forward_and_reference.1} parent=1 // pred_region
      _
    $region29: #{_forward_and_reference.1} parent=1 // pred_fallthru
      _
    // Predicated region
    $region30: #{_forward_and_reference.1} parent=1 // pred_check
      _
    $region31: #{_forward_and_reference.1} parent=1 // pred_check_branch
      %35 = sbr.rel (0) target = $region33
    $region32: #{_forward_and_reference.1} parent=1 // pred_region
      _
    $region33: #{_forward_and_reference.1} parent=1 // pred_fallthru
      _
    // Predicated region
    $region34: #{_forward_and_reference.1} parent=1 // pred_check
      _
    $region35: #{_forward_and_reference.1} parent=1 // pred_check_branch
      %37 = sbr.rel (0) target = $region37
    $region36: #{_forward_and_reference.1} parent=1 // pred_region
      _
    $region37: #{_forward_and_reference.1} parent=1 // pred_fallthru
      _
    // Predicated region
    $region38: #{_forward_and_reference.1} parent=1 // pred_check
      _
    $region39: #{_forward_and_reference.1} parent=1 // pred_check_branch
      %39 = sbr.rel (0) target = $region41
    $region40: #{_forward_and_reference.1} parent=1 // pred_region
      _
    $region41: #{_forward_and_reference.1} parent=1 // pred_fallthru
      _
    // Predicated region
    $region42: #{_forward_and_reference.1} parent=1 // pred_check
      _
    $region43: #{_forward_and_reference.1} parent=1 // pred_check_branch
      %41 = sbr.rel (0) target = $region45
    $region44: #{_forward_and_reference.1} parent=1 // pred_region
      _
    $region45: #{_forward_and_reference.1} parent=1 // pred_fallthru
      _
    // Predicated region
    $region46: #{_forward_and_reference.1} parent=1 // pred_check
      _
    $region47: #{_forward_and_reference.1} parent=1 // pred_check_branch
      %43 = sbr.rel (0) target = $region49
    $region48: #{_forward_and_reference.1} parent=1 // pred_region
      _
    $region49: #{_forward_and_reference.1} parent=1 // pred_fallthru
      _
    %v45 = vld [vmem:[%s0] sm:$0xff]
    %v46 = vld [vmem:[%s1] sm:$0xff]
    %v47 = vld [vmem:[%s1 + $0x8] sm:$0xff]
    %v48 = vld [vmem:[%s1 + $0x10] sm:$0xff]
    %v49 = vld [vmem:[%s1 + $0x18] sm:$0xff]
    %v50 = vld [vmem:[%s1 + $0x20] sm:$0xff]
    %v51 = vld [vmem:[%s1 + $0x28] sm:$0xff]
    %v52 = vld [vmem:[%s1 + $0x30] sm:$0xff]
    %v53 = vld [vmem:[%s1 + $0x38] sm:$0xff]
    %v54 = vld [vmem:[%s1 + $0x40] sm:$0xff]
    %v55 = vld [vmem:[%s1 + $0x48] sm:$0xff]
    %v56 = vld [vmem:[%s1 + $0x50] sm:$0xff]
    %v57 = vld [vmem:[%s1 + $0x58] sm:$0xff]
    %v58 = vld [vmem:[%s1 + $0x60] sm:$0xff]
    %v59 = vld [vmem:[%s1 + $0x68] sm:$0xff]
    %v60 = vld [vmem:[%s1 + $0x70] sm:$0xff]
    %v61 = vld [vmem:[%s1 + $0x78] sm:$0xff]
    %v62 = vld [vmem:[%s1 + $0x80] sm:$0xff]
    %v63 = vld [vmem:[%s1 + $0x88] sm:$0xff]
    %v64 = vld [vmem:[%s1 + $0x90] sm:$0xff]
    %v65 = vld [vmem:[%s1 + $0x98] sm:$0xff]
    %v66 = vld [vmem:[%s1 + $0xa0] sm:$0xff]
    %v67 = vld [vmem:[%s1 + $0xa8] sm:$0xff]
    %v68 = vld [vmem:[%s1 + $0xb0] sm:$0xff]
    %v69 = vld [vmem:[%s1 + $0xb8] sm:$0xff]
    %v70 = vld [vmem:[%s1 + $0xc0] sm:$0xff]
    %v71 = vld [vmem:[%s1 + $0xc8] sm:$0xff]
    %v72 = vld [vmem:[%s1 + $0xd0] sm:$0xff]
    %v73 = vld [vmem:[%s1 + $0xd8] sm:$0xff]
    %v74 = vld [vmem:[%s1 + $0xe0] sm:$0xff]
    %v75 = vld [vmem:[%s1 + $0xe8] sm:$0xff]
    %v76 = vld [vmem:[%s1 + $0xf0] sm:$0xff]
    %v77 = vld [vmem:[%s1 + $0xf8] sm:$0xff]
    %v78 = vld [vmem:[%s1 + $0x100] sm:$0xff]
    %v79 = vld [vmem:[%s1 + $0x108] sm:$0xff]
    %v80 = vld [vmem:[%s1 + $0x110] sm:$0xff]
    %v81 = vld [vmem:[%s1 + $0x118] sm:$0xff]
    %v82 = vld [vmem:[%s1 + $0x120] sm:$0xff]
    %v83 = vld [vmem:[%s1 + $0x128] sm:$0xff]
    %v84 = vld [vmem:[%s1 + $0x130] sm:$0xff]
    %v85 = vld [vmem:[%s1 + $0x138] sm:$0xff]
    %v86 = vld [vmem:[%s1 + $0x140] sm:$0xff]
    %v87 = vld [vmem:[%s1 + $0x148] sm:$0xff]
    %v88 = vld [vmem:[%s1 + $0x150] sm:$0xff]
    %v89 = vld [vmem:[%s1 + $0x158] sm:$0xff]
    %v90 = vld [vmem:[%s1 + $0x160] sm:$0xff]
    %v91 = vld [vmem:[%s1 + $0x168] sm:$0xff]
    %v92 = vld [vmem:[%s1 + $0x170] sm:$0xff]
    %v93 = vld [vmem:[%s1 + $0x178] sm:$0xff]
    %v94 = vld [vmem:[%s1 + $0x180] sm:$0xff]
    %v95 = vld [vmem:[%s1 + $0x188] sm:$0xff]
    %v96 = vld [vmem:[%s1 + $0x190] sm:$0xff]
    %v97 = vld [vmem:[%s1 + $0x198] sm:$0xff]
    %v98 = vld [vmem:[%s1 + $0x1a0] sm:$0xff]
    %v99 = vld [vmem:[%s1 + $0x1a8] sm:$0xff]
    %v100 = vld [vmem:[%s1 + $0x1b0] sm:$0xff]
    %v101 = vld [vmem:[%s1 + $0x1b8] sm:$0xff]
    %v102 = vld [vmem:[%s1 + $0x1c0] sm:$0xff]
    %v103 = vld [vmem:[%s1 + $0x1c8] sm:$0xff]
    %v104 = vld [vmem:[%s1 + $0x1d0] sm:$0xff]
    %v105 = vld [vmem:[%s1 + $0x1d8] sm:$0xff]
    %v106 = vld [vmem:[%s1 + $0x1e0] sm:$0xff]
    %v107 = vld [vmem:[%s1 + $0x1e8] sm:$0xff]
    %v108 = vld [vmem:[%s1 + $0x1f0] sm:$0xff]
    %v109 = vld [vmem:[%s1 + $0x1f8] sm:$0xff]
    %v110 = vld [vmem:[%s1 + $0x200] sm:$0xff]
    %v111 = vld [vmem:[%s1 + $0x208] sm:$0xff]
    %v112 = vld [vmem:[%s1 + $0x210] sm:$0xff]
    %v113 = vld [vmem:[%s1 + $0x218] sm:$0xff]
    %v114 = vld [vmem:[%s1 + $0x220] sm:$0xff]
    %v115 = vld [vmem:[%s1 + $0x228] sm:$0xff]
    %v116 = vld [vmem:[%s1 + $0x230] sm:$0xff]
    %v117 = vld [vmem:[%s1 + $0x238] sm:$0xff]
    %v118 = vld [vmem:[%s1 + $0x240] sm:$0xff]
    %v119 = vld [vmem:[%s1 + $0x248] sm:$0xff]
    %v120 = vld [vmem:[%s1 + $0x250] sm:$0xff]
    %v121 = vld [vmem:[%s1 + $0x258] sm:$0xff]
    %v122 = vld [vmem:[%s1 + $0x260] sm:$0xff]
    %v123 = vld [vmem:[%s1 + $0x268] sm:$0xff]
    %v124 = vld [vmem:[%s1 + $0x270] sm:$0xff]
    %v125 = vld [vmem:[%s1 + $0x278] sm:$0xff]
    %v126 = vld [vmem:[%s1 + $0x280] sm:$0xff]
    %v127 = vld [vmem:[%s1 + $0x288] sm:$0xff]
    %v128 = vld [vmem:[%s1 + $0x290] sm:$0xff]
    %v129 = vld [vmem:[%s1 + $0x298] sm:$0xff]
    %v130 = vld [vmem:[%s1 + $0x2a0] sm:$0xff]
    %v131 = vld [vmem:[%s1 + $0x2a8] sm:$0xff]
    %v132 = vld [vmem:[%s1 + $0x2b0] sm:$0xff]
    %v133 = vld [vmem:[%s1 + $0x2b8] sm:$0xff]
    %v134 = vld [vmem:[%s1 + $0x2c0] sm:$0xff]
    %v135 = vld [vmem:[%s1 + $0x2c8] sm:$0xff]
    %v136 = vld [vmem:[%s1 + $0x2d0] sm:$0xff]
    %v137 = vld [vmem:[%s1 + $0x2d8] sm:$0xff]
    %v138 = vld [vmem:[%s1 + $0x2e0] sm:$0xff]
    %v139 = vld [vmem:[%s1 + $0x2e8] sm:$0xff]
    %v140 = vld [vmem:[%s1 + $0x2f0] sm:$0xff]
    %v141 = vld [vmem:[%s1 + $0x2f8] sm:$0xff]
    %v142 = vld [vmem:[%s1 + $0x300] sm:$0xff]
    %v143 = vld [vmem:[%s1 + $0x308] sm:$0xff]
    %v144 = vld [vmem:[%s1 + $0x310] sm:$0xff]
    %v145 = vld [vmem:[%s1 + $0x318] sm:$0xff]
    %v146 = vld [vmem:[%s1 + $0x320] sm:$0xff]
    %v147 = vld [vmem:[%s1 + $0x328] sm:$0xff]
    %v148 = vld [vmem:[%s1 + $0x330] sm:$0xff]
    %v149 = vld [vmem:[%s1 + $0x338] sm:$0xff]
    %v150 = vld [vmem:[%s1 + $0x340] sm:$0xff]
    %v151 = vld [vmem:[%s1 + $0x348] sm:$0xff]
    %v152 = vld [vmem:[%s1 + $0x350] sm:$0xff]
    %v153 = vld [vmem:[%s1 + $0x358] sm:$0xff]
    %v154 = vld [vmem:[%s1 + $0x360] sm:$0xff]
    %v155 = vld [vmem:[%s1 + $0x368] sm:$0xff]
    %v156 = vld [vmem:[%s1 + $0x370] sm:$0xff]
    %v157 = vld [vmem:[%s1 + $0x378] sm:$0xff]
    %v158 = vld [vmem:[%s1 + $0x380] sm:$0xff]
    %v159 = vld [vmem:[%s1 + $0x388] sm:$0xff]
    %v160 = vld [vmem:[%s1 + $0x390] sm:$0xff]
    %v161 = vld [vmem:[%s1 + $0x398] sm:$0xff]
    %v162 = vld [vmem:[%s1 + $0x3a0] sm:$0xff]
    %v163 = vld [vmem:[%s1 + $0x3a8] sm:$0xff]
    %v164 = vld [vmem:[%s1 + $0x3b0] sm:$0xff]
    %v165 = vld [vmem:[%s1 + $0x3b8] sm:$0xff]
    %v166 = vld [vmem:[%s1 + $0x3c0] sm:$0xff]
    %v167 = vld [vmem:[%s1 + $0x3c8] sm:$0xff]
    %v168 = vld [vmem:[%s1 + $0x3d0] sm:$0xff]
    %v169 = vld [vmem:[%s1 + $0x3d8] sm:$0xff]
    %v170 = vld [vmem:[%s1 + $0x3e0] sm:$0xff]
    %v171 = vld [vmem:[%s1 + $0x3e8] sm:$0xff]
    %v172 = vld [vmem:[%s1 + $0x3f0] sm:$0xff]
    %v173 = vld [vmem:[%s1 + $0x3f8] sm:$0xff]
    %v174 = vld [vmem:[%s1 + $0x400] sm:$0xff]
    %v175 = vld [vmem:[%s1 + $0x408] sm:$0xff]
    %v176 = vld [vmem:[%s1 + $0x410] sm:$0xff]
    %v177 = vld [vmem:[%s1 + $0x418] sm:$0xff]
    %v178 = vld [vmem:[%s1 + $0x420] sm:$0xff]
    %v179 = vld [vmem:[%s1 + $0x428] sm:$0xff]
    %v180 = vld [vmem:[%s1 + $0x430] sm:$0xff]
    %v181 = vld [vmem:[%s1 + $0x438] sm:$0xff]
    %v182 = vld [vmem:[%s1 + $0x440] sm:$0xff]
    %v183 = vld [vmem:[%s1 + $0x448] sm:$0xff]
    %v184 = vld [vmem:[%s1 + $0x450] sm:$0xff]
    %v185 = vld [vmem:[%s1 + $0x458] sm:$0xff]
    %v186 = vld [vmem:[%s1 + $0x460] sm:$0xff]
    %v187 = vld [vmem:[%s1 + $0x468] sm:$0xff]
    %v188 = vld [vmem:[%s1 + $0x470] sm:$0xff]
    %v189 = vld [vmem:[%s1 + $0x478] sm:$0xff]
    %v190 = vld [vmem:[%s1 + $0x480] sm:$0xff]
    %v191 = vld [vmem:[%s1 + $0x488] sm:$0xff]
    %v192 = vld [vmem:[%s1 + $0x490] sm:$0xff]
    %v193 = vld [vmem:[%s1 + $0x498] sm:$0xff]
    %v194 = vld [vmem:[%s1 + $0x4a0] sm:$0xff]
    %v195 = vld [vmem:[%s1 + $0x4a8] sm:$0xff]
    %v196 = vld [vmem:[%s1 + $0x4b0] sm:$0xff]
    %v197 = vld [vmem:[%s1 + $0x4b8] sm:$0xff]
    %v198 = vld [vmem:[%s1 + $0x4c0] sm:$0xff]
    %v199 = vld [vmem:[%s1 + $0x4c8] sm:$0xff]
    %v200 = vld [vmem:[%s1 + $0x4d0] sm:$0xff]
    %v201 = vld [vmem:[%s1 + $0x4d8] sm:$0xff]
    %v202 = vld [vmem:[%s1 + $0x4e0] sm:$0xff]
    %v203 = vld [vmem:[%s1 + $0x4e8] sm:$0xff]
    %v204 = vld [vmem:[%s1 + $0x4f0] sm:$0xff]
    %v205 = vld [vmem:[%s1 + $0x4f8] sm:$0xff]
    %v206 = vld [vmem:[%s1 + $0x500] sm:$0xff]
    %v207 = vld [vmem:[%s1 + $0x508] sm:$0xff]
    %v208 = vld [vmem:[%s1 + $0x510] sm:$0xff]
    %v209 = vld [vmem:[%s1 + $0x518] sm:$0xff]
    %v210 = vld [vmem:[%s1 + $0x520] sm:$0xff]
    %v211 = vld [vmem:[%s1 + $0x528] sm:$0xff]
    %v212 = vld [vmem:[%s1 + $0x530] sm:$0xff]
    %v213 = vld [vmem:[%s1 + $0x538] sm:$0xff]
    %v214 = vld [vmem:[%s1 + $0x540] sm:$0xff]
    %v215 = vld [vmem:[%s1 + $0x548] sm:$0xff]
    %v216 = vld [vmem:[%s1 + $0x550] sm:$0xff]
    %v217 = vld [vmem:[%s1 + $0x558] sm:$0xff]
    %v218 = vld [vmem:[%s1 + $0x560] sm:$0xff]
    %v219 = vld [vmem:[%s1 + $0x568] sm:$0xff]
    %v220 = vld [vmem:[%s1 + $0x570] sm:$0xff]
    %v221 = vld [vmem:[%s1 + $0x578] sm:$0xff]
    %v222 = vld [vmem:[%s1 + $0x580] sm:$0xff]
    %v223 = vld [vmem:[%s1 + $0x588] sm:$0xff]
    %v224 = vld [vmem:[%s1 + $0x590] sm:$0xff]
    %v225 = vld [vmem:[%s1 + $0x598] sm:$0xff]
    %v226 = vld [vmem:[%s1 + $0x5a0] sm:$0xff]
    %v227 = vld [vmem:[%s1 + $0x5a8] sm:$0xff]
    %v228 = vld [vmem:[%s1 + $0x5b0] sm:$0xff]
    %v229 = vld [vmem:[%s1 + $0x5b8] sm:$0xff]
    %v230 = vld [vmem:[%s1 + $0x5c0] sm:$0xff]
    %v231 = vld [vmem:[%s1 + $0x5c8] sm:$0xff]
    %v232 = vld [vmem:[%s1 + $0x5d0] sm:$0xff]
    %v233 = vld [vmem:[%s1 + $0x5d8] sm:$0xff]
    %v234 = vld [vmem:[%s1 + $0x5e0] sm:$0xff]
    %v235 = vld [vmem:[%s1 + $0x5e8] sm:$0xff]
    %v236 = vld [vmem:[%s1 + $0x5f0] sm:$0xff]
    %v237 = vld [vmem:[%s1 + $0x5f8] sm:$0xff]
    %v238 = vld [vmem:[%s1 + $0x600] sm:$0xff]
    %v239 = vld [vmem:[%s1 + $0x608] sm:$0xff]
    %v240 = vld [vmem:[%s1 + $0x610] sm:$0xff]
    %v241 = vld [vmem:[%s1 + $0x618] sm:$0xff]
    %v242 = vld [vmem:[%s1 + $0x620] sm:$0xff]
    %v243 = vld [vmem:[%s1 + $0x628] sm:$0xff]
    %v244 = vld [vmem:[%s1 + $0x630] sm:$0xff]
    %v245 = vld [vmem:[%s1 + $0x638] sm:$0xff]
    %v246 = vld [vmem:[%s1 + $0x640] sm:$0xff]
    %v247 = vld [vmem:[%s1 + $0x648] sm:$0xff]
    %v248 = vld [vmem:[%s1 + $0x650] sm:$0xff]
    %v249 = vld [vmem:[%s1 + $0x658] sm:$0xff]
    %v250 = vld [vmem:[%s1 + $0x660] sm:$0xff]
    %v251 = vld [vmem:[%s1 + $0x668] sm:$0xff]
    %v252 = vld [vmem:[%s1 + $0x670] sm:$0xff]
    %v253 = vld [vmem:[%s1 + $0x678] sm:$0xff]
    %v254 = vld [vmem:[%s1 + $0x680] sm:$0xff]
    %v255 = vld [vmem:[%s1 + $0x688] sm:$0xff]
    %v256 = vld [vmem:[%s1 + $0x690] sm:$0xff]
    %v257 = vld [vmem:[%s1 + $0x698] sm:$0xff]
    %v258 = vld [vmem:[%s1 + $0x6a0] sm:$0xff]
    %v259 = vld [vmem:[%s1 + $0x6a8] sm:$0xff]
    %v260 = vld [vmem:[%s1 + $0x6b0] sm:$0xff]
    %v261 = vld [vmem:[%s1 + $0x6b8] sm:$0xff]
    %v262 = vld [vmem:[%s1 + $0x6c0] sm:$0xff]
    %v263 = vld [vmem:[%s1 + $0x6c8] sm:$0xff]
    %v264 = vld [vmem:[%s1 + $0x6d0] sm:$0xff]
    %v265 = vld [vmem:[%s1 + $0x6d8] sm:$0xff]
    %v266 = vld [vmem:[%s1 + $0x6e0] sm:$0xff]
    %v267 = vld [vmem:[%s1 + $0x6e8] sm:$0xff]
    %v268 = vld [vmem:[%s1 + $0x6f0] sm:$0xff]
    %v269 = vld [vmem:[%s1 + $0x6f8] sm:$0xff]
    %v270 = vld [vmem:[%s1 + $0x700] sm:$0xff]
    %v271 = vld [vmem:[%s1 + $0x708] sm:$0xff]
    %v272 = vld [vmem:[%s1 + $0x710] sm:$0xff]
    %v273 = vld [vmem:[%s1 + $0x718] sm:$0xff]
    %v274 = vld [vmem:[%s1 + $0x720] sm:$0xff]
    %v275 = vld [vmem:[%s1 + $0x728] sm:$0xff]
    %v276 = vld [vmem:[%s1 + $0x730] sm:$0xff]
    %v277 = vld [vmem:[%s1 + $0x738] sm:$0xff]
    %v278 = vld [vmem:[%s1 + $0x740] sm:$0xff]
    %v279 = vld [vmem:[%s1 + $0x748] sm:$0xff]
    %v280 = vld [vmem:[%s1 + $0x750] sm:$0xff]
    %v281 = vld [vmem:[%s1 + $0x758] sm:$0xff]
    %v282 = vld [vmem:[%s1 + $0x760] sm:$0xff]
    %v283 = vld [vmem:[%s1 + $0x768] sm:$0xff]
    %v284 = vld [vmem:[%s1 + $0x770] sm:$0xff]
    %v285 = vld [vmem:[%s1 + $0x778] sm:$0xff]
    %v287 = vcombine.high %v45, %v45
    %v289 = vunpack.c.l.s4 1966171168
    %v290 = vunpack.c.0.s8 %v289
    %v291 = vlaneseq
    %v292 = vshrl.u32 %v291, 7
    %v293 = vsub.s32 %v290, %v292
    %v294 = vrot.slane %v45, %v293
    %v296 = vunpack.c.l.s4 1966171168
    %v297 = vunpack.c.0.s8 %v296
    %v298 = vlaneseq
    %v299 = vshrl.u32 %v298, 7
    %v300 = vsub.s32 %v297, %v299
    %v301 = vrot.slane %v287, %v300
    %v302 = vcombine.high %v294, %v294
    %v303 = vcombine.high %v301, %v301
    %v305 = vunpack.c.l.s4 1966171168
    %v306 = vunpack.c.0.s8 %v305
    %v307 = vlaneseq
    %v308 = vshrl.u32 %v307, 7
    %v309 = vsub.s32 %v306, %v308
    %v310 = vrot.slane %v294, %v309
    %v312 = vunpack.c.l.s4 1966171168
    %v313 = vunpack.c.0.s8 %v312
    %v314 = vlaneseq
    %v315 = vshrl.u32 %v314, 7
    %v316 = vsub.s32 %v313, %v315
    %v317 = vrot.slane %v301, %v316
    %v319 = vunpack.c.l.s4 1966171168
    %v320 = vunpack.c.0.s8 %v319
    %v321 = vlaneseq
    %v322 = vshrl.u32 %v321, 7
    %v323 = vsub.s32 %v320, %v322
    %v324 = vrot.slane %v302, %v323
    %v326 = vunpack.c.l.s4 1966171168
    %v327 = vunpack.c.0.s8 %v326
    %v328 = vlaneseq
    %v329 = vshrl.u32 %v328, 7
    %v330 = vsub.s32 %v327, %v329
    %v331 = vrot.slane %v303, %v330
    %v332 = vcombine.high %v310, %v310
    %v333 = vcombine.high %v317, %v317
    %v334 = vcombine.high %v324, %v324
    %v335 = vcombine.high %v331, %v331
    %v583 = vunpack.c.l.b16 %v46
    %v584 = vunpack.c.h.b16 %v46
    %v585 = vunpack.c.l.b16 %v47
    %v586 = vunpack.c.h.b16 %v47
    %v587 = vunpack.c.l.b16 %v48
    %v588 = vunpack.c.h.b16 %v48
    %v589 = vunpack.c.l.b16 %v49
    %v590 = vunpack.c.h.b16 %v49
    %v591 = vunpack.c.l.b16 %v50
    %v592 = vunpack.c.h.b16 %v50
    %v593 = vunpack.c.l.b16 %v51
    %v594 = vunpack.c.h.b16 %v51
    %v595 = vunpack.c.l.b16 %v52
    %v596 = vunpack.c.h.b16 %v52
    %v597 = vunpack.c.l.b16 %v53
    %v598 = vunpack.c.h.b16 %v53
    %v599 = vunpack.c.l.b16 %v54
    %v600 = vunpack.c.h.b16 %v54
    %v601 = vunpack.c.l.b16 %v55
    %v602 = vunpack.c.h.b16 %v55
    %v603 = vunpack.c.l.b16 %v56
    %v604 = vunpack.c.h.b16 %v56
    %v605 = vunpack.c.l.b16 %v57
    %v606 = vunpack.c.h.b16 %v57
    %v607 = vunpack.c.l.b16 %v58
    %v608 = vunpack.c.h.b16 %v58
    %v609 = vunpack.c.l.b16 %v59
    %v610 = vunpack.c.h.b16 %v59
    %v611 = vunpack.c.l.b16 %v60
    %v612 = vunpack.c.h.b16 %v60
    %v613 = vunpack.c.l.b16 %v61
    %v614 = vunpack.c.h.b16 %v61
    %v615 = vunpack.c.l.b16 %v62
    %v616 = vunpack.c.h.b16 %v62
    %v617 = vunpack.c.l.b16 %v63
    %v618 = vunpack.c.h.b16 %v63
    %v619 = vunpack.c.l.b16 %v64
    %v620 = vunpack.c.h.b16 %v64
    %v621 = vunpack.c.l.b16 %v65
    %v622 = vunpack.c.h.b16 %v65
    %v623 = vunpack.c.l.b16 %v66
    %v624 = vunpack.c.h.b16 %v66
    %v625 = vunpack.c.l.b16 %v67
    %v626 = vunpack.c.h.b16 %v67
    %v627 = vunpack.c.l.b16 %v68
    %v628 = vunpack.c.h.b16 %v68
    %v629 = vunpack.c.l.b16 %v69
    %v630 = vunpack.c.h.b16 %v69
    %v631 = vunpack.c.l.b16 %v70
    %v632 = vunpack.c.h.b16 %v70
    %v633 = vunpack.c.l.b16 %v71
    %v634 = vunpack.c.h.b16 %v71
    %v635 = vunpack.c.l.b16 %v72
    %v636 = vunpack.c.h.b16 %v72
    %v637 = vunpack.c.l.b16 %v73
    %v638 = vunpack.c.h.b16 %v73
    %v639 = vunpack.c.l.b16 %v74
    %v640 = vunpack.c.h.b16 %v74
    %v641 = vunpack.c.l.b16 %v75
    %v642 = vunpack.c.h.b16 %v75
    %v643 = vunpack.c.l.b16 %v76
    %v644 = vunpack.c.h.b16 %v76
    %v645 = vunpack.c.l.b16 %v77
    %v646 = vunpack.c.h.b16 %v77
    %v647 = vunpack.c.l.b16 %v78
    %v648 = vunpack.c.h.b16 %v78
    %v649 = vunpack.c.l.b16 %v79
    %v650 = vunpack.c.h.b16 %v79
    %v651 = vunpack.c.l.b16 %v80
    %v652 = vunpack.c.h.b16 %v80
    %v653 = vunpack.c.l.b16 %v81
    %v654 = vunpack.c.h.b16 %v81
    %v655 = vunpack.c.l.b16 %v82
    %v656 = vunpack.c.h.b16 %v82
    %v657 = vunpack.c.l.b16 %v83
    %v658 = vunpack.c.h.b16 %v83
    %v659 = vunpack.c.l.b16 %v84
    %v660 = vunpack.c.h.b16 %v84
    %v661 = vunpack.c.l.b16 %v85
    %v662 = vunpack.c.h.b16 %v85
    %v663 = vunpack.c.l.b16 %v86
    %v664 = vunpack.c.h.b16 %v86
    %v665 = vunpack.c.l.b16 %v87
    %v666 = vunpack.c.h.b16 %v87
    %v667 = vunpack.c.l.b16 %v88
    %v668 = vunpack.c.h.b16 %v88
    %v669 = vunpack.c.l.b16 %v89
    %v670 = vunpack.c.h.b16 %v89
    %v671 = vunpack.c.l.b16 %v90
    %v672 = vunpack.c.h.b16 %v90
    %v673 = vunpack.c.l.b16 %v91
    %v674 = vunpack.c.h.b16 %v91
    %v675 = vunpack.c.l.b16 %v92
    %v676 = vunpack.c.h.b16 %v92
    %v677 = vunpack.c.l.b16 %v93
    %v678 = vunpack.c.h.b16 %v93
    %v679 = vunpack.c.l.b16 %v94
    %v680 = vunpack.c.h.b16 %v94
    %v681 = vunpack.c.l.b16 %v95
    %v682 = vunpack.c.h.b16 %v95
    %v683 = vunpack.c.l.b16 %v96
    %v684 = vunpack.c.h.b16 %v96
    %v685 = vunpack.c.l.b16 %v97
    %v686 = vunpack.c.h.b16 %v97
    %v687 = vunpack.c.l.b16 %v98
    %v688 = vunpack.c.h.b16 %v98
    %v689 = vunpack.c.l.b16 %v99
    %v690 = vunpack.c.h.b16 %v99
    %v691 = vunpack.c.l.b16 %v100
    %v692 = vunpack.c.h.b16 %v100
    %v693 = vunpack.c.l.b16 %v101
    %v694 = vunpack.c.h.b16 %v101
    %v695 = vunpack.c.l.b16 %v102
    %v696 = vunpack.c.h.b16 %v102
    %v697 = vunpack.c.l.b16 %v103
    %v698 = vunpack.c.h.b16 %v103
    %v699 = vunpack.c.l.b16 %v104
    %v700 = vunpack.c.h.b16 %v104
    %v701 = vunpack.c.l.b16 %v105
    %v702 = vunpack.c.h.b16 %v105
    %v703 = vunpack.c.l.b16 %v106
    %v704 = vunpack.c.h.b16 %v106
    %v705 = vunpack.c.l.b16 %v107
    %v706 = vunpack.c.h.b16 %v107
    %v707 = vunpack.c.l.b16 %v108
    %v708 = vunpack.c.h.b16 %v108
    %v709 = vunpack.c.l.b16 %v109
    %v710 = vunpack.c.h.b16 %v109
    %v711 = vunpack.c.l.b16 %v110
    %v712 = vunpack.c.h.b16 %v110
    %v713 = vunpack.c.l.b16 %v111
    %v714 = vunpack.c.h.b16 %v111
    %v715 = vunpack.c.l.b16 %v112
    %v716 = vunpack.c.h.b16 %v112
    %v717 = vunpack.c.l.b16 %v113
    %v718 = vunpack.c.h.b16 %v113
    %v719 = vunpack.c.l.b16 %v114
    %v720 = vunpack.c.h.b16 %v114
    %v721 = vunpack.c.l.b16 %v115
    %v722 = vunpack.c.h.b16 %v115
    %v723 = vunpack.c.l.b16 %v116
    %v724 = vunpack.c.h.b16 %v116
    %v725 = vunpack.c.l.b16 %v117
    %v726 = vunpack.c.h.b16 %v117
    %v727 = vunpack.c.l.b16 %v118
    %v728 = vunpack.c.h.b16 %v118
    %v729 = vunpack.c.l.b16 %v119
    %v730 = vunpack.c.h.b16 %v119
    %v731 = vunpack.c.l.b16 %v120
    %v732 = vunpack.c.h.b16 %v120
    %v733 = vunpack.c.l.b16 %v121
    %v734 = vunpack.c.h.b16 %v121
    %v735 = vunpack.c.l.b16 %v122
    %v736 = vunpack.c.h.b16 %v122
    %v737 = vunpack.c.l.b16 %v123
    %v738 = vunpack.c.h.b16 %v123
    %v739 = vunpack.c.l.b16 %v124
    %v740 = vunpack.c.h.b16 %v124
    %v741 = vunpack.c.l.b16 %v125
    %v742 = vunpack.c.h.b16 %v125
    %v743 = vunpack.c.l.b16 %v126
    %v744 = vunpack.c.h.b16 %v126
    %v745 = vunpack.c.l.b16 %v127
    %v746 = vunpack.c.h.b16 %v127
    %v747 = vunpack.c.l.b16 %v128
    %v748 = vunpack.c.h.b16 %v128
    %v749 = vunpack.c.l.b16 %v129
    %v750 = vunpack.c.h.b16 %v129
    %v751 = vunpack.c.l.b16 %v130
    %v752 = vunpack.c.h.b16 %v130
    %v753 = vunpack.c.l.b16 %v131
    %v754 = vunpack.c.h.b16 %v131
    %v755 = vunpack.c.l.b16 %v132
    %v756 = vunpack.c.h.b16 %v132
    %v757 = vunpack.c.l.b16 %v133
    %v758 = vunpack.c.h.b16 %v133
    %v759 = vunpack.c.l.b16 %v134
    %v760 = vunpack.c.h.b16 %v134
    %v761 = vunpack.c.l.b16 %v135
    %v762 = vunpack.c.h.b16 %v135
    %v763 = vunpack.c.l.b16 %v136
    %v764 = vunpack.c.h.b16 %v136
    %v765 = vunpack.c.l.b16 %v137
    %v766 = vunpack.c.h.b16 %v137
    %v767 = vunpack.c.l.b16 %v138
    %v768 = vunpack.c.h.b16 %v138
    %v769 = vunpack.c.l.b16 %v139
    %v770 = vunpack.c.h.b16 %v139
    %v771 = vunpack.c.l.b16 %v140
    %v772 = vunpack.c.h.b16 %v140
    %v773 = vunpack.c.l.b16 %v141
    %v774 = vunpack.c.h.b16 %v141
    %v775 = vunpack.c.l.b16 %v142
    %v776 = vunpack.c.h.b16 %v142
    %v777 = vunpack.c.l.b16 %v143
    %v778 = vunpack.c.h.b16 %v143
    %v779 = vunpack.c.l.b16 %v144
    %v780 = vunpack.c.h.b16 %v144
    %v781 = vunpack.c.l.b16 %v145
    %v782 = vunpack.c.h.b16 %v145
    %v783 = vunpack.c.l.b16 %v146
    %v784 = vunpack.c.h.b16 %v146
    %v785 = vunpack.c.l.b16 %v147
    %v786 = vunpack.c.h.b16 %v147
    %v787 = vunpack.c.l.b16 %v148
    %v788 = vunpack.c.h.b16 %v148
    %v789 = vunpack.c.l.b16 %v149
    %v790 = vunpack.c.h.b16 %v149
    %v791 = vunpack.c.l.b16 %v150
    %v792 = vunpack.c.h.b16 %v150
    %v793 = vunpack.c.l.b16 %v151
    %v794 = vunpack.c.h.b16 %v151
    %v795 = vunpack.c.l.b16 %v152
    %v796 = vunpack.c.h.b16 %v152
    %v797 = vunpack.c.l.b16 %v153
    %v798 = vunpack.c.h.b16 %v153
    %v799 = vunpack.c.l.b16 %v154
    %v800 = vunpack.c.h.b16 %v154
    %v801 = vunpack.c.l.b16 %v155
    %v802 = vunpack.c.h.b16 %v155
    %v803 = vunpack.c.l.b16 %v156
    %v804 = vunpack.c.h.b16 %v156
    %v805 = vunpack.c.l.b16 %v157
    %v806 = vunpack.c.h.b16 %v157
    %v807 = vunpack.c.l.b16 %v158
    %v808 = vunpack.c.h.b16 %v158
    %v809 = vunpack.c.l.b16 %v159
    %v810 = vunpack.c.h.b16 %v159
    %v811 = vunpack.c.l.b16 %v160
    %v812 = vunpack.c.h.b16 %v160
    %v813 = vunpack.c.l.b16 %v161
    %v814 = vunpack.c.h.b16 %v161
    %v815 = vunpack.c.l.b16 %v162
    %v816 = vunpack.c.h.b16 %v162
    %v817 = vunpack.c.l.b16 %v163
    %v818 = vunpack.c.h.b16 %v163
    %v819 = vunpack.c.l.b16 %v164
    %v820 = vunpack.c.h.b16 %v164
    %v821 = vunpack.c.l.b16 %v165
    %v822 = vunpack.c.h.b16 %v165
    %v823 = vunpack.c.l.b16 %v166
    %v824 = vunpack.c.h.b16 %v166
    %v825 = vunpack.c.l.b16 %v167
    %v826 = vunpack.c.h.b16 %v167
    %v827 = vunpack.c.l.b16 %v168
    %v828 = vunpack.c.h.b16 %v168
    %v829 = vunpack.c.l.b16 %v169
    %v830 = vunpack.c.h.b16 %v169
    %v831 = vunpack.c.l.b16 %v170
    %v832 = vunpack.c.h.b16 %v170
    %v833 = vunpack.c.l.b16 %v171
    %v834 = vunpack.c.h.b16 %v171
    %v835 = vunpack.c.l.b16 %v172
    %v836 = vunpack.c.h.b16 %v172
    %v837 = vunpack.c.l.b16 %v173
    %v838 = vunpack.c.h.b16 %v173
    %v839 = vunpack.c.l.b16 %v174
    %v840 = vunpack.c.h.b16 %v174
    %v841 = vunpack.c.l.b16 %v175
    %v842 = vunpack.c.h.b16 %v175
    %v843 = vunpack.c.l.b16 %v176
    %v844 = vunpack.c.h.b16 %v176
    %v845 = vunpack.c.l.b16 %v177
    %v846 = vunpack.c.h.b16 %v177
    %v847 = vunpack.c.l.b16 %v178
    %v848 = vunpack.c.h.b16 %v178
    %v849 = vunpack.c.l.b16 %v179
    %v850 = vunpack.c.h.b16 %v179
    %v851 = vunpack.c.l.b16 %v180
    %v852 = vunpack.c.h.b16 %v180
    %v853 = vunpack.c.l.b16 %v181
    %v854 = vunpack.c.h.b16 %v181
    %v855 = vunpack.c.l.b16 %v182
    %v856 = vunpack.c.h.b16 %v182
    %v857 = vunpack.c.l.b16 %v183
    %v858 = vunpack.c.h.b16 %v183
    %v859 = vunpack.c.l.b16 %v184
    %v860 = vunpack.c.h.b16 %v184
    %v861 = vunpack.c.l.b16 %v185
    %v862 = vunpack.c.h.b16 %v185
    %v863 = vunpack.c.l.b16 %v186
    %v864 = vunpack.c.h.b16 %v186
    %v865 = vunpack.c.l.b16 %v187
    %v866 = vunpack.c.h.b16 %v187
    %v867 = vunpack.c.l.b16 %v188
    %v868 = vunpack.c.h.b16 %v188
    %v869 = vunpack.c.l.b16 %v189
    %v870 = vunpack.c.h.b16 %v189
    %v871 = vunpack.c.l.b16 %v190
    %v872 = vunpack.c.h.b16 %v190
    %v873 = vunpack.c.l.b16 %v191
    %v874 = vunpack.c.h.b16 %v191
    %v875 = vunpack.c.l.b16 %v192
    %v876 = vunpack.c.h.b16 %v192
    %v877 = vunpack.c.l.b16 %v193
    %v878 = vunpack.c.h.b16 %v193
    %v879 = vunpack.c.l.b16 %v194
    %v880 = vunpack.c.h.b16 %v194
    %v881 = vunpack.c.l.b16 %v195
    %v882 = vunpack.c.h.b16 %v195
    %v883 = vunpack.c.l.b16 %v196
    %v884 = vunpack.c.h.b16 %v196
    %v885 = vunpack.c.l.b16 %v197
    %v886 = vunpack.c.h.b16 %v197
    %v887 = vunpack.c.l.b16 %v198
    %v888 = vunpack.c.h.b16 %v198
    %v889 = vunpack.c.l.b16 %v199
    %v890 = vunpack.c.h.b16 %v199
    %v891 = vunpack.c.l.b16 %v200
    %v892 = vunpack.c.h.b16 %v200
    %v893 = vunpack.c.l.b16 %v201
    %v894 = vunpack.c.h.b16 %v201
    %v895 = vunpack.c.l.b16 %v202
    %v896 = vunpack.c.h.b16 %v202
    %v897 = vunpack.c.l.b16 %v203
    %v898 = vunpack.c.h.b16 %v203
    %v899 = vunpack.c.l.b16 %v204
    %v900 = vunpack.c.h.b16 %v204
    %v901 = vunpack.c.l.b16 %v205
    %v902 = vunpack.c.h.b16 %v205
    %v903 = vunpack.c.l.b16 %v206
    %v904 = vunpack.c.h.b16 %v206
    %v905 = vunpack.c.l.b16 %v207
    %v906 = vunpack.c.h.b16 %v207
    %v907 = vunpack.c.l.b16 %v208
    %v908 = vunpack.c.h.b16 %v208
    %v909 = vunpack.c.l.b16 %v209
    %v910 = vunpack.c.h.b16 %v209
    %v911 = vunpack.c.l.b16 %v210
    %v912 = vunpack.c.h.b16 %v210
    %v913 = vunpack.c.l.b16 %v211
    %v914 = vunpack.c.h.b16 %v211
    %v915 = vunpack.c.l.b16 %v212
    %v916 = vunpack.c.h.b16 %v212
    %v917 = vunpack.c.l.b16 %v213
    %v918 = vunpack.c.h.b16 %v213
    %v919 = vunpack.c.l.b16 %v214
    %v920 = vunpack.c.h.b16 %v214
    %v921 = vunpack.c.l.b16 %v215
    %v922 = vunpack.c.h.b16 %v215
    %v923 = vunpack.c.l.b16 %v216
    %v924 = vunpack.c.h.b16 %v216
    %v925 = vunpack.c.l.b16 %v217
    %v926 = vunpack.c.h.b16 %v217
    %v927 = vunpack.c.l.b16 %v218
    %v928 = vunpack.c.h.b16 %v218
    %v929 = vunpack.c.l.b16 %v219
    %v930 = vunpack.c.h.b16 %v219
    %v931 = vunpack.c.l.b16 %v220
    %v932 = vunpack.c.h.b16 %v220
    %v933 = vunpack.c.l.b16 %v221
    %v934 = vunpack.c.h.b16 %v221
    %v935 = vunpack.c.l.b16 %v222
    %v936 = vunpack.c.h.b16 %v222
    %v937 = vunpack.c.l.b16 %v223
    %v938 = vunpack.c.h.b16 %v223
    %v939 = vunpack.c.l.b16 %v224
    %v940 = vunpack.c.h.b16 %v224
    %v941 = vunpack.c.l.b16 %v225
    %v942 = vunpack.c.h.b16 %v225
    %v943 = vunpack.c.l.b16 %v226
    %v944 = vunpack.c.h.b16 %v226
    %v945 = vunpack.c.l.b16 %v227
    %v946 = vunpack.c.h.b16 %v227
    %v947 = vunpack.c.l.b16 %v228
    %v948 = vunpack.c.h.b16 %v228
    %v949 = vunpack.c.l.b16 %v229
    %v950 = vunpack.c.h.b16 %v229
    %v951 = vunpack.c.l.b16 %v230
    %v952 = vunpack.c.h.b16 %v230
    %v953 = vunpack.c.l.b16 %v231
    %v954 = vunpack.c.h.b16 %v231
    %v955 = vunpack.c.l.b16 %v232
    %v956 = vunpack.c.h.b16 %v232
    %v957 = vunpack.c.l.b16 %v233
    %v958 = vunpack.c.h.b16 %v233
    %v959 = vunpack.c.l.b16 %v234
    %v960 = vunpack.c.h.b16 %v234
    %v961 = vunpack.c.l.b16 %v235
    %v962 = vunpack.c.h.b16 %v235
    %v963 = vunpack.c.l.b16 %v236
    %v964 = vunpack.c.h.b16 %v236
    %v965 = vunpack.c.l.b16 %v237
    %v966 = vunpack.c.h.b16 %v237
    %v967 = vunpack.c.l.b16 %v238
    %v968 = vunpack.c.h.b16 %v238
    %v969 = vunpack.c.l.b16 %v239
    %v970 = vunpack.c.h.b16 %v239
    %v971 = vunpack.c.l.b16 %v240
    %v972 = vunpack.c.h.b16 %v240
    %v973 = vunpack.c.l.b16 %v241
    %v974 = vunpack.c.h.b16 %v241
    %v975 = vunpack.c.l.b16 %v242
    %v976 = vunpack.c.h.b16 %v242
    %v977 = vunpack.c.l.b16 %v243
    %v978 = vunpack.c.h.b16 %v243
    %v979 = vunpack.c.l.b16 %v244
    %v980 = vunpack.c.h.b16 %v244
    %v981 = vunpack.c.l.b16 %v245
    %v982 = vunpack.c.h.b16 %v245
    %v983 = vunpack.c.l.b16 %v246
    %v984 = vunpack.c.h.b16 %v246
    %v985 = vunpack.c.l.b16 %v247
    %v986 = vunpack.c.h.b16 %v247
    %v987 = vunpack.c.l.b16 %v248
    %v988 = vunpack.c.h.b16 %v248
    %v989 = vunpack.c.l.b16 %v249
    %v990 = vunpack.c.h.b16 %v249
    %v991 = vunpack.c.l.b16 %v250
    %v992 = vunpack.c.h.b16 %v250
    %v993 = vunpack.c.l.b16 %v251
    %v994 = vunpack.c.h.b16 %v251
    %v995 = vunpack.c.l.b16 %v252
    %v996 = vunpack.c.h.b16 %v252
    %v997 = vunpack.c.l.b16 %v253
    %v998 = vunpack.c.h.b16 %v253
    %v999 = vunpack.c.l.b16 %v254
    %v1000 = vunpack.c.h.b16 %v254
    %v1001 = vunpack.c.l.b16 %v255
    %v1002 = vunpack.c.h.b16 %v255
    %v1003 = vunpack.c.l.b16 %v256
    %v1004 = vunpack.c.h.b16 %v256
    %v1005 = vunpack.c.l.b16 %v257
    %v1006 = vunpack.c.h.b16 %v257
    %v1007 = vunpack.c.l.b16 %v258
    %v1008 = vunpack.c.h.b16 %v258
    %v1009 = vunpack.c.l.b16 %v259
    %v1010 = vunpack.c.h.b16 %v259
    %v1011 = vunpack.c.l.b16 %v260
    %v1012 = vunpack.c.h.b16 %v260
    %v1013 = vunpack.c.l.b16 %v261
    %v1014 = vunpack.c.h.b16 %v261
    %v1015 = vunpack.c.l.b16 %v262
    %v1016 = vunpack.c.h.b16 %v262
    %v1017 = vunpack.c.l.b16 %v263
    %v1018 = vunpack.c.h.b16 %v263
    %v1019 = vunpack.c.l.b16 %v264
    %v1020 = vunpack.c.h.b16 %v264
    %v1021 = vunpack.c.l.b16 %v265
    %v1022 = vunpack.c.h.b16 %v265
    %v1023 = vunpack.c.l.b16 %v266
    %v1024 = vunpack.c.h.b16 %v266
    %v1025 = vunpack.c.l.b16 %v267
    %v1026 = vunpack.c.h.b16 %v267
    %v1027 = vunpack.c.l.b16 %v268
    %v1028 = vunpack.c.h.b16 %v268
    %v1029 = vunpack.c.l.b16 %v269
    %v1030 = vunpack.c.h.b16 %v269
    %v1031 = vunpack.c.l.b16 %v270
    %v1032 = vunpack.c.h.b16 %v270
    %v1033 = vunpack.c.l.b16 %v271
    %v1034 = vunpack.c.h.b16 %v271
    %v1035 = vunpack.c.l.b16 %v272
    %v1036 = vunpack.c.h.b16 %v272
    %v1037 = vunpack.c.l.b16 %v273
    %v1038 = vunpack.c.h.b16 %v273
    %v1039 = vunpack.c.l.b16 %v274
    %v1040 = vunpack.c.h.b16 %v274
    %v1041 = vunpack.c.l.b16 %v275
    %v1042 = vunpack.c.h.b16 %v275
    %v1043 = vunpack.c.l.b16 %v276
    %v1044 = vunpack.c.h.b16 %v276
    %v1045 = vunpack.c.l.b16 %v277
    %v1046 = vunpack.c.h.b16 %v277
    %v1047 = vunpack.c.l.b16 %v278
    %v1048 = vunpack.c.h.b16 %v278
    %v1049 = vunpack.c.l.b16 %v279
    %v1050 = vunpack.c.h.b16 %v279
    %v1051 = vunpack.c.l.b16 %v280
    %v1052 = vunpack.c.h.b16 %v280
    %v1053 = vunpack.c.l.b16 %v281
    %v1054 = vunpack.c.h.b16 %v281
    %v1055 = vunpack.c.l.b16 %v282
    %v1056 = vunpack.c.h.b16 %v282
    %v1057 = vunpack.c.l.b16 %v283
    %v1058 = vunpack.c.h.b16 %v283
    %v1059 = vunpack.c.l.b16 %v284
    %v1060 = vunpack.c.h.b16 %v284
    %v1061 = vunpack.c.l.b16 %v285
    %v1062 = vunpack.c.h.b16 %v285
    %v1063 = vpack.c.b16 %v587, %v583
    %v1064 = vpack.c.b16 %v588, %v584
    %v1065 = vpack.c.b16 %v589, %v585
    %v1066 = vpack.c.b16 %v590, %v586
    %v1067 = vpack.c.b16 %v595, %v591
    %v1068 = vpack.c.b16 %v596, %v592
    %v1069 = vpack.c.b16 %v597, %v593
    %v1070 = vpack.c.b16 %v598, %v594
    %v1071 = vpack.c.b16 %v603, %v599
    %v1072 = vpack.c.b16 %v604, %v600
    %v1073 = vpack.c.b16 %v605, %v601
    %v1074 = vpack.c.b16 %v606, %v602
    %v1075 = vpack.c.b16 %v611, %v607
    %v1076 = vpack.c.b16 %v612, %v608
    %v1077 = vpack.c.b16 %v613, %v609
    %v1078 = vpack.c.b16 %v614, %v610
    %v1079 = vpack.c.b16 %v619, %v615
    %v1080 = vpack.c.b16 %v620, %v616
    %v1081 = vpack.c.b16 %v621, %v617
    %v1082 = vpack.c.b16 %v622, %v618
    %v1083 = vpack.c.b16 %v627, %v623
    %v1084 = vpack.c.b16 %v628, %v624
    %v1085 = vpack.c.b16 %v629, %v625
    %v1086 = vpack.c.b16 %v630, %v626
    %v1087 = vpack.c.b16 %v635, %v631
    %v1088 = vpack.c.b16 %v636, %v632
    %v1089 = vpack.c.b16 %v637, %v633
    %v1090 = vpack.c.b16 %v638, %v634
    %v1091 = vpack.c.b16 %v643, %v639
    %v1092 = vpack.c.b16 %v644, %v640
    %v1093 = vpack.c.b16 %v645, %v641
    %v1094 = vpack.c.b16 %v646, %v642
    %v1095 = vpack.c.b16 %v651, %v647
    %v1096 = vpack.c.b16 %v652, %v648
    %v1097 = vpack.c.b16 %v653, %v649
    %v1098 = vpack.c.b16 %v654, %v650
    %v1099 = vpack.c.b16 %v659, %v655
    %v1100 = vpack.c.b16 %v660, %v656
    %v1101 = vpack.c.b16 %v661, %v657
    %v1102 = vpack.c.b16 %v662, %v658
    %v1103 = vpack.c.b16 %v667, %v663
    %v1104 = vpack.c.b16 %v668, %v664
    %v1105 = vpack.c.b16 %v669, %v665
    %v1106 = vpack.c.b16 %v670, %v666
    %v1107 = vpack.c.b16 %v675, %v671
    %v1108 = vpack.c.b16 %v676, %v672
    %v1109 = vpack.c.b16 %v677, %v673
    %v1110 = vpack.c.b16 %v678, %v674
    %v1111 = vpack.c.b16 %v683, %v679
    %v1112 = vpack.c.b16 %v684, %v680
    %v1113 = vpack.c.b16 %v685, %v681
    %v1114 = vpack.c.b16 %v686, %v682
    %v1115 = vpack.c.b16 %v691, %v687
    %v1116 = vpack.c.b16 %v692, %v688
    %v1117 = vpack.c.b16 %v693, %v689
    %v1118 = vpack.c.b16 %v694, %v690
    %v1119 = vpack.c.b16 %v699, %v695
    %v1120 = vpack.c.b16 %v700, %v696
    %v1121 = vpack.c.b16 %v701, %v697
    %v1122 = vpack.c.b16 %v702, %v698
    %v1123 = vpack.c.b16 %v707, %v703
    %v1124 = vpack.c.b16 %v708, %v704
    %v1125 = vpack.c.b16 %v709, %v705
    %v1126 = vpack.c.b16 %v710, %v706
    %v1127 = vpack.c.b16 %v715, %v711
    %v1128 = vpack.c.b16 %v716, %v712
    %v1129 = vpack.c.b16 %v717, %v713
    %v1130 = vpack.c.b16 %v718, %v714
    %v1131 = vpack.c.b16 %v723, %v719
    %v1132 = vpack.c.b16 %v724, %v720
    %v1133 = vpack.c.b16 %v725, %v721
    %v1134 = vpack.c.b16 %v726, %v722
    %v1135 = vpack.c.b16 %v731, %v727
    %v1136 = vpack.c.b16 %v732, %v728
    %v1137 = vpack.c.b16 %v733, %v729
    %v1138 = vpack.c.b16 %v734, %v730
    %v1139 = vpack.c.b16 %v739, %v735
    %v1140 = vpack.c.b16 %v740, %v736
    %v1141 = vpack.c.b16 %v741, %v737
    %v1142 = vpack.c.b16 %v742, %v738
    %v1143 = vpack.c.b16 %v747, %v743
    %v1144 = vpack.c.b16 %v748, %v744
    %v1145 = vpack.c.b16 %v749, %v745
    %v1146 = vpack.c.b16 %v750, %v746
    %v1147 = vpack.c.b16 %v755, %v751
    %v1148 = vpack.c.b16 %v756, %v752
    %v1149 = vpack.c.b16 %v757, %v753
    %v1150 = vpack.c.b16 %v758, %v754
    %v1151 = vpack.c.b16 %v763, %v759
    %v1152 = vpack.c.b16 %v764, %v760
    %v1153 = vpack.c.b16 %v765, %v761
    %v1154 = vpack.c.b16 %v766, %v762
    %v1155 = vpack.c.b16 %v771, %v767
    %v1156 = vpack.c.b16 %v772, %v768
    %v1157 = vpack.c.b16 %v773, %v769
    %v1158 = vpack.c.b16 %v774, %v770
    %v1159 = vpack.c.b16 %v779, %v775
    %v1160 = vpack.c.b16 %v780, %v776
    %v1161 = vpack.c.b16 %v781, %v777
    %v1162 = vpack.c.b16 %v782, %v778
    %v1163 = vpack.c.b16 %v787, %v783
    %v1164 = vpack.c.b16 %v788, %v784
    %v1165 = vpack.c.b16 %v789, %v785
    %v1166 = vpack.c.b16 %v790, %v786
    %v1167 = vpack.c.b16 %v795, %v791
    %v1168 = vpack.c.b16 %v796, %v792
    %v1169 = vpack.c.b16 %v797, %v793
    %v1170 = vpack.c.b16 %v798, %v794
    %v1171 = vpack.c.b16 %v803, %v799
    %v1172 = vpack.c.b16 %v804, %v800
    %v1173 = vpack.c.b16 %v805, %v801
    %v1174 = vpack.c.b16 %v806, %v802
    %v1175 = vpack.c.b16 %v811, %v807
    %v1176 = vpack.c.b16 %v812, %v808
    %v1177 = vpack.c.b16 %v813, %v809
    %v1178 = vpack.c.b16 %v814, %v810
    %v1179 = vpack.c.b16 %v819, %v815
    %v1180 = vpack.c.b16 %v820, %v816
    %v1181 = vpack.c.b16 %v821, %v817
    %v1182 = vpack.c.b16 %v822, %v818
    %v1183 = vpack.c.b16 %v827, %v823
    %v1184 = vpack.c.b16 %v828, %v824
    %v1185 = vpack.c.b16 %v829, %v825
    %v1186 = vpack.c.b16 %v830, %v826
    %v1187 = vpack.c.b16 %v835, %v831
    %v1188 = vpack.c.b16 %v836, %v832
    %v1189 = vpack.c.b16 %v837, %v833
    %v1190 = vpack.c.b16 %v838, %v834
    %v1191 = vpack.c.b16 %v843, %v839
    %v1192 = vpack.c.b16 %v844, %v840
    %v1193 = vpack.c.b16 %v845, %v841
    %v1194 = vpack.c.b16 %v846, %v842
    %v1195 = vpack.c.b16 %v851, %v847
    %v1196 = vpack.c.b16 %v852, %v848
    %v1197 = vpack.c.b16 %v853, %v849
    %v1198 = vpack.c.b16 %v854, %v850
    %v1199 = vpack.c.b16 %v859, %v855
    %v1200 = vpack.c.b16 %v860, %v856
    %v1201 = vpack.c.b16 %v861, %v857
    %v1202 = vpack.c.b16 %v862, %v858
    %v1203 = vpack.c.b16 %v867, %v863
    %v1204 = vpack.c.b16 %v868, %v864
    %v1205 = vpack.c.b16 %v869, %v865
    %v1206 = vpack.c.b16 %v870, %v866
    %v1207 = vpack.c.b16 %v875, %v871
    %v1208 = vpack.c.b16 %v876, %v872
    %v1209 = vpack.c.b16 %v877, %v873
    %v1210 = vpack.c.b16 %v878, %v874
    %v1211 = vpack.c.b16 %v883, %v879
    %v1212 = vpack.c.b16 %v884, %v880
    %v1213 = vpack.c.b16 %v885, %v881
    %v1214 = vpack.c.b16 %v886, %v882
    %v1215 = vpack.c.b16 %v891, %v887
    %v1216 = vpack.c.b16 %v892, %v888
    %v1217 = vpack.c.b16 %v893, %v889
    %v1218 = vpack.c.b16 %v894, %v890
    %v1219 = vpack.c.b16 %v899, %v895
    %v1220 = vpack.c.b16 %v900, %v896
    %v1221 = vpack.c.b16 %v901, %v897
    %v1222 = vpack.c.b16 %v902, %v898
    %v1223 = vpack.c.b16 %v907, %v903
    %v1224 = vpack.c.b16 %v908, %v904
    %v1225 = vpack.c.b16 %v909, %v905
    %v1226 = vpack.c.b16 %v910, %v906
    %v1227 = vpack.c.b16 %v915, %v911
    %v1228 = vpack.c.b16 %v916, %v912
    %v1229 = vpack.c.b16 %v917, %v913
    %v1230 = vpack.c.b16 %v918, %v914
    %v1231 = vpack.c.b16 %v923, %v919
    %v1232 = vpack.c.b16 %v924, %v920
    %v1233 = vpack.c.b16 %v925, %v921
    %v1234 = vpack.c.b16 %v926, %v922
    %v1235 = vpack.c.b16 %v931, %v927
    %v1236 = vpack.c.b16 %v932, %v928
    %v1237 = vpack.c.b16 %v933, %v929
    %v1238 = vpack.c.b16 %v934, %v930
    %v1239 = vpack.c.b16 %v939, %v935
    %v1240 = vpack.c.b16 %v940, %v936
    %v1241 = vpack.c.b16 %v941, %v937
    %v1242 = vpack.c.b16 %v942, %v938
    %v1243 = vpack.c.b16 %v947, %v943
    %v1244 = vpack.c.b16 %v948, %v944
    %v1245 = vpack.c.b16 %v949, %v945
    %v1246 = vpack.c.b16 %v950, %v946
    %v1247 = vpack.c.b16 %v955, %v951
    %v1248 = vpack.c.b16 %v956, %v952
    %v1249 = vpack.c.b16 %v957, %v953
    %v1250 = vpack.c.b16 %v958, %v954
    %v1251 = vpack.c.b16 %v963, %v959
    %v1252 = vpack.c.b16 %v964, %v960
    %v1253 = vpack.c.b16 %v965, %v961
    %v1254 = vpack.c.b16 %v966, %v962
    %v1255 = vpack.c.b16 %v971, %v967
    %v1256 = vpack.c.b16 %v972, %v968
    %v1257 = vpack.c.b16 %v973, %v969
    %v1258 = vpack.c.b16 %v974, %v970
    %v1259 = vpack.c.b16 %v979, %v975
    %v1260 = vpack.c.b16 %v980, %v976
    %v1261 = vpack.c.b16 %v981, %v977
    %v1262 = vpack.c.b16 %v982, %v978
    %v1263 = vpack.c.b16 %v987, %v983
    %v1264 = vpack.c.b16 %v988, %v984
    %v1265 = vpack.c.b16 %v989, %v985
    %v1266 = vpack.c.b16 %v990, %v986
    %v1267 = vpack.c.b16 %v995, %v991
    %v1268 = vpack.c.b16 %v996, %v992
    %v1269 = vpack.c.b16 %v997, %v993
    %v1270 = vpack.c.b16 %v998, %v994
    %v1271 = vpack.c.b16 %v1003, %v999
    %v1272 = vpack.c.b16 %v1004, %v1000
    %v1273 = vpack.c.b16 %v1005, %v1001
    %v1274 = vpack.c.b16 %v1006, %v1002
    %v1275 = vpack.c.b16 %v1011, %v1007
    %v1276 = vpack.c.b16 %v1012, %v1008
    %v1277 = vpack.c.b16 %v1013, %v1009
    %v1278 = vpack.c.b16 %v1014, %v1010
    %v1279 = vpack.c.b16 %v1019, %v1015
    %v1280 = vpack.c.b16 %v1020, %v1016
    %v1281 = vpack.c.b16 %v1021, %v1017
    %v1282 = vpack.c.b16 %v1022, %v1018
    %v1283 = vpack.c.b16 %v1027, %v1023
    %v1284 = vpack.c.b16 %v1028, %v1024
    %v1285 = vpack.c.b16 %v1029, %v1025
    %v1286 = vpack.c.b16 %v1030, %v1026
    %v1287 = vpack.c.b16 %v1035, %v1031
    %v1288 = vpack.c.b16 %v1036, %v1032
    %v1289 = vpack.c.b16 %v1037, %v1033
    %v1290 = vpack.c.b16 %v1038, %v1034
    %v1291 = vpack.c.b16 %v1043, %v1039
    %v1292 = vpack.c.b16 %v1044, %v1040
    %v1293 = vpack.c.b16 %v1045, %v1041
    %v1294 = vpack.c.b16 %v1046, %v1042
    %v1295 = vpack.c.b16 %v1051, %v1047
    %v1296 = vpack.c.b16 %v1052, %v1048
    %v1297 = vpack.c.b16 %v1053, %v1049
    %v1298 = vpack.c.b16 %v1054, %v1050
    %v1299 = vpack.c.b16 %v1059, %v1055
    %v1300 = vpack.c.b16 %v1060, %v1056
    %v1301 = vpack.c.b16 %v1061, %v1057
    %v1302 = vpack.c.b16 %v1062, %v1058
    %vm1543 = vcmask 523264
    %v1545 = vsel %vm1543, %v335, 0
    %1547 = vmatprep.subr.bf16.mxu0 %v1064
    %1548 = vmatpush1.bf16.msra.mxu0 %v1063
    %1549 = vmatprep.subr.bf16.mxu0 %v1068
    %1550 = vmatpush1.bf16.msra.mxu0 %v1067
    %1551 = vmatprep.subr.bf16.mxu0 %v1072
    %1552 = vmatpush1.bf16.msra.mxu0 %v1071
    %1553 = vmatprep.subr.bf16.mxu0 %v1076
    %1554 = vmatpush1.bf16.msra.mxu0 %v1075
    %1555 = vmatprep.subr.bf16.mxu0 %v1080
    %1556 = vmatpush1.bf16.msra.mxu0 %v1079
    %1557 = vmatprep.subr.bf16.mxu0 %v1084
    %1558 = vmatpush1.bf16.msra.mxu0 %v1083
    %1559 = vmatprep.subr.bf16.mxu0 %v1088
    %1560 = vmatpush1.bf16.msra.mxu0 %v1087
    %1561 = vmatprep.subr.bf16.mxu0 %v1092
    %1562 = vmatpush1.bf16.msra.mxu0 %v1091
    %1563 = vmatprep.subr.bf16.mxu0 %v1096
    %1564 = vmatpush1.bf16.msra.mxu0 %v1095
    %1565 = vmatprep.subr.bf16.mxu0 %v1100
    %1566 = vmatpush1.bf16.msra.mxu0 %v1099
    %1567 = vmatprep.subr.bf16.mxu0 %v1104
    %1568 = vmatpush1.bf16.msra.mxu0 %v1103
    %1569 = vmatprep.subr.bf16.mxu0 %v1108
    %1570 = vmatpush1.bf16.msra.mxu0 %v1107
    %1571 = vmatprep.subr.bf16.mxu0 %v1112
    %1572 = vmatpush1.bf16.msra.mxu0 %v1111
    %1573 = vmatprep.subr.bf16.mxu0 %v1116
    %1574 = vmatpush1.bf16.msra.mxu0 %v1115
    %1575 = vmatprep.subr.bf16.mxu0 %v1120
    %1576 = vmatpush1.bf16.msra.mxu0 %v1119
    %1577 = vmatprep.subr.bf16.mxu0 %v1124
    %1578 = vmatpush1.bf16.msra.mxu0 %v1123
    %1579 = vmatprep.mubr.bf16.mxu0 %v324
    %1580 = vmatmul.mubr.bf16.gmra.mrb[0].mxu0 %v310
    %v1581 = vpop.f32.mrb[0].mxu0
    %v1582 = vadd.f32 0.0, %v1581
    %v1583 = vpop.f32.mrb[0].mxu0
    %v1584 = vadd.f32 0.0, %v1583
    %v1585 = vpop.f32.mrb[0].mxu0
    %v1586 = vpop.f32.mrb[0].mxu0
    %1587 = vdwg.mxu0
    %1588 = vmatprep.subr.bf16.mxu0 %v1128
    %1589 = vmatpush1.bf16.msra.mxu0 %v1127
    %1590 = vmatprep.subr.bf16.mxu0 %v1132
    %1591 = vmatpush1.bf16.msra.mxu0 %v1131
    %1592 = vmatprep.subr.bf16.mxu0 %v1136
    %1593 = vmatpush1.bf16.msra.mxu0 %v1135
    %1594 = vmatprep.subr.bf16.mxu0 %v1140
    %1595 = vmatpush1.bf16.msra.mxu0 %v1139
    %1596 = vmatprep.subr.bf16.mxu0 %v1144
    %1597 = vmatpush1.bf16.msra.mxu0 %v1143
    %1598 = vmatprep.subr.bf16.mxu0 %v1148
    %1599 = vmatpush1.bf16.msra.mxu0 %v1147
    %1600 = vmatprep.subr.bf16.mxu0 %v1152
    %1601 = vmatpush1.bf16.msra.mxu0 %v1151
    %1602 = vmatprep.subr.bf16.mxu0 %v1156
    %1603 = vmatpush1.bf16.msra.mxu0 %v1155
    %1604 = vmatprep.subr.bf16.mxu0 %v1160
    %1605 = vmatpush1.bf16.msra.mxu0 %v1159
    %1606 = vmatprep.subr.bf16.mxu0 %v1164
    %1607 = vmatpush1.bf16.msra.mxu0 %v1163
    %1608 = vmatprep.subr.bf16.mxu0 %v1168
    %1609 = vmatpush1.bf16.msra.mxu0 %v1167
    %1610 = vmatprep.subr.bf16.mxu0 %v1172
    %1611 = vmatpush1.bf16.msra.mxu0 %v1171
    %1612 = vmatprep.subr.bf16.mxu0 %v1176
    %1613 = vmatpush1.bf16.msra.mxu0 %v1175
    %1614 = vmatprep.subr.bf16.mxu0 %v1180
    %1615 = vmatpush1.bf16.msra.mxu0 %v1179
    %1616 = vmatprep.subr.bf16.mxu0 %v1184
    %1617 = vmatpush1.bf16.msra.mxu0 %v1183
    %1618 = vmatprep.subr.bf16.mxu0 %v1188
    %1619 = vmatpush1.bf16.msra.mxu0 %v1187
    %1620 = vmatprep.mubr.bf16.mxu0 %v334
    %1621 = vmatmul.mubr.bf16.gmra.mrb[0].mxu0 %v332
    %v1622 = vpop.f32.mrb[0].mxu0
    %v1623 = vadd.f32 %v1582, %v1622
    %v1624 = vpop.f32.mrb[0].mxu0
    %v1625 = vadd.f32 %v1584, %v1624
    %v1626 = vpop.f32.mrb[0].mxu0
    %v1627 = vpop.f32.mrb[0].mxu0
    %1628 = vdwg.mxu0
    %1629 = vmatprep.subr.bf16.mxu0 %v1192
    %1630 = vmatpush1.bf16.msra.mxu0 %v1191
    %1631 = vmatprep.subr.bf16.mxu0 %v1196
    %1632 = vmatpush1.bf16.msra.mxu0 %v1195
    %1633 = vmatprep.subr.bf16.mxu0 %v1200
    %1634 = vmatpush1.bf16.msra.mxu0 %v1199
    %1635 = vmatprep.subr.bf16.mxu0 %v1204
    %1636 = vmatpush1.bf16.msra.mxu0 %v1203
    %1637 = vmatprep.subr.bf16.mxu0 %v1208
    %1638 = vmatpush1.bf16.msra.mxu0 %v1207
    %1639 = vmatprep.subr.bf16.mxu0 %v1212
    %1640 = vmatpush1.bf16.msra.mxu0 %v1211
    %1641 = vmatprep.subr.bf16.mxu0 %v1216
    %1642 = vmatpush1.bf16.msra.mxu0 %v1215
    %1643 = vmatprep.subr.bf16.mxu0 %v1220
    %1644 = vmatpush1.bf16.msra.mxu0 %v1219
    %1645 = vmatprep.subr.bf16.mxu0 %v1224
    %1646 = vmatpush1.bf16.msra.mxu0 %v1223
    %1647 = vmatprep.subr.bf16.mxu0 %v1228
    %1648 = vmatpush1.bf16.msra.mxu0 %v1227
    %1649 = vmatprep.subr.bf16.mxu0 %v1232
    %1650 = vmatpush1.bf16.msra.mxu0 %v1231
    %1651 = vmatprep.subr.bf16.mxu0 %v1236
    %1652 = vmatpush1.bf16.msra.mxu0 %v1235
    %1653 = vmatprep.subr.bf16.mxu0 %v1240
    %1654 = vmatpush1.bf16.msra.mxu0 %v1239
    %1655 = vmatprep.subr.bf16.mxu0 %v1244
    %1656 = vmatpush1.bf16.msra.mxu0 %v1243
    %1657 = vmatprep.subr.bf16.mxu0 %v1248
    %1658 = vmatpush1.bf16.msra.mxu0 %v1247
    %1659 = vmatprep.subr.bf16.mxu0 %v1252
    %1660 = vmatpush1.bf16.msra.mxu0 %v1251
    %1661 = vmatprep.mubr.bf16.mxu0 %v331
    %1662 = vmatmul.mubr.bf16.gmra.mrb[0].mxu0 %v317
    %v1663 = vpop.f32.mrb[0].mxu0
    %v1664 = vadd.f32 %v1623, %v1663
    %v1665 = vpop.f32.mrb[0].mxu0
    %v1666 = vadd.f32 %v1625, %v1665
    %v1667 = vpop.f32.mrb[0].mxu0
    %v1668 = vpop.f32.mrb[0].mxu0
    %1669 = vdwg.mxu0
    %1670 = vmatprep.subr.bf16.mxu0 %v1256
    %1671 = vmatpush1.bf16.msra.mxu0 %v1255
    %1672 = vmatprep.subr.bf16.mxu0 %v1260
    %1673 = vmatpush1.bf16.msra.mxu0 %v1259
    %1674 = vmatprep.subr.bf16.mxu0 %v1264
    %1675 = vmatpush1.bf16.msra.mxu0 %v1263
    %1676 = vmatprep.subr.bf16.mxu0 %v1268
    %1677 = vmatpush1.bf16.msra.mxu0 %v1267
    %1678 = vmatprep.subr.bf16.mxu0 %v1272
    %1679 = vmatpush1.bf16.msra.mxu0 %v1271
    %1680 = vmatprep.subr.bf16.mxu0 %v1276
    %1681 = vmatpush1.bf16.msra.mxu0 %v1275
    %1682 = vmatprep.subr.bf16.mxu0 %v1280
    %1683 = vmatpush1.bf16.msra.mxu0 %v1279
    %1684 = vmatprep.subr.bf16.mxu0 %v1284
    %1685 = vmatpush1.bf16.msra.mxu0 %v1283
    %1686 = vmatprep.subr.bf16.mxu0 %v1288
    %1687 = vmatpush1.bf16.msra.mxu0 %v1287
    %1688 = vmatprep.subr.bf16.mxu0 %v1292
    %1689 = vmatpush1.bf16.msra.mxu0 %v1291
    %1690 = vmatprep.subr.bf16.mxu0 %v1296
    %1691 = vmatpush1.bf16.msra.mxu0 %v1295
    %1692 = vmatprep.subr.bf16.mxu0 %v1300
    %1693 = vmatpush1.bf16.msra.mxu0 %v1299
    %1694 = vmatprep.subr.bf16.mxu0 0
    %1695 = vmatpush1.bf16.msra.mxu0 0
    %1696 = vmatprep.subr.bf16.mxu0 0
    %1697 = vmatpush1.bf16.msra.mxu0 0
    %1698 = vmatprep.subr.bf16.mxu0 0
    %1699 = vmatpush1.bf16.msra.mxu0 0
    %1700 = vmatprep.subr.bf16.mxu0 0
    %1701 = vmatpush1.bf16.msra.mxu0 0
    %1702 = vmatprep.mubr.bf16.mxu0 %v1545
    %1703 = vmatmul.mubr.bf16.gmra.mrb[0].mxu0 %v333
    %v1704 = vpop.f32.mrb[0].mxu0
    %v1705 = vadd.f32 %v1664, %v1704
    %v1706 = vpop.f32.mrb[0].mxu0
    %v1707 = vadd.f32 %v1666, %v1706
    %v1708 = vpop.f32.mrb[0].mxu0
    %v1709 = vpop.f32.mrb[0].mxu0
    %1710 = vdwg.mxu0
    %1711 = vmatprep.subr.bf16.mxu0 %v1066
    %1712 = vmatpush1.bf16.msra.mxu0 %v1065
    %1713 = vmatprep.subr.bf16.mxu0 %v1070
    %1714 = vmatpush1.bf16.msra.mxu0 %v1069
    %1715 = vmatprep.subr.bf16.mxu0 %v1074
    %1716 = vmatpush1.bf16.msra.mxu0 %v1073
    %1717 = vmatprep.subr.bf16.mxu0 %v1078
    %1718 = vmatpush1.bf16.msra.mxu0 %v1077
    %1719 = vmatprep.subr.bf16.mxu0 %v1082
    %1720 = vmatpush1.bf16.msra.mxu0 %v1081
    %1721 = vmatprep.subr.bf16.mxu0 %v1086
    %1722 = vmatpush1.bf16.msra.mxu0 %v1085
    %1723 = vmatprep.subr.bf16.mxu0 %v1090
    %1724 = vmatpush1.bf16.msra.mxu0 %v1089
    %1725 = vmatprep.subr.bf16.mxu0 %v1094
    %1726 = vmatpush1.bf16.msra.mxu0 %v1093
    %1727 = vmatprep.subr.bf16.mxu0 %v1098
    %1728 = vmatpush1.bf16.msra.mxu0 %v1097
    %1729 = vmatprep.subr.bf16.mxu0 %v1102
    %1730 = vmatpush1.bf16.msra.mxu0 %v1101
    %1731 = vmatprep.subr.bf16.mxu0 %v1106
    %1732 = vmatpush1.bf16.msra.mxu0 %v1105
    %1733 = vmatprep.subr.bf16.mxu0 %v1110
    %1734 = vmatpush1.bf16.msra.mxu0 %v1109
    %1735 = vmatprep.subr.bf16.mxu0 %v1114
    %1736 = vmatpush1.bf16.msra.mxu0 %v1113
    %1737 = vmatprep.subr.bf16.mxu0 %v1118
    %1738 = vmatpush1.bf16.msra.mxu0 %v1117
    %1739 = vmatprep.subr.bf16.mxu0 %v1122
    %1740 = vmatpush1.bf16.msra.mxu0 %v1121
    %1741 = vmatprep.subr.bf16.mxu0 %v1126
    %1742 = vmatpush1.bf16.msra.mxu0 %v1125
    %1743 = vmatprep.mubr.bf16.mxu0 %v324
    %1744 = vmatmul.mubr.bf16.gmra.mrb[0].mxu0 %v310
    %v1745 = vpop.f32.mrb[0].mxu0
    %v1746 = vadd.f32 0.0, %v1745
    %v1747 = vpop.f32.mrb[0].mxu0
    %v1748 = vadd.f32 0.0, %v1747
    %v1749 = vpop.f32.mrb[0].mxu0
    %v1750 = vpop.f32.mrb[0].mxu0
    %1751 = vdwg.mxu0
    %1752 = vmatprep.subr.bf16.mxu0 %v1130
    %1753 = vmatpush1.bf16.msra.mxu0 %v1129
    %1754 = vmatprep.subr.bf16.mxu0 %v1134
    %1755 = vmatpush1.bf16.msra.mxu0 %v1133
    %1756 = vmatprep.subr.bf16.mxu0 %v1138
    %1757 = vmatpush1.bf16.msra.mxu0 %v1137
    %1758 = vmatprep.subr.bf16.mxu0 %v1142
    %1759 = vmatpush1.bf16.msra.mxu0 %v1141
    %1760 = vmatprep.subr.bf16.mxu0 %v1146
    %1761 = vmatpush1.bf16.msra.mxu0 %v1145
    %1762 = vmatprep.subr.bf16.mxu0 %v1150
    %1763 = vmatpush1.bf16.msra.mxu0 %v1149
    %1764 = vmatprep.subr.bf16.mxu0 %v1154
    %1765 = vmatpush1.bf16.msra.mxu0 %v1153
    %1766 = vmatprep.subr.bf16.mxu0 %v1158
    %1767 = vmatpush1.bf16.msra.mxu0 %v1157
    %1768 = vmatprep.subr.bf16.mxu0 %v1162
    %1769 = vmatpush1.bf16.msra.mxu0 %v1161
    %1770 = vmatprep.subr.bf16.mxu0 %v1166
    %1771 = vmatpush1.bf16.msra.mxu0 %v1165
    %1772 = vmatprep.subr.bf16.mxu0 %v1170
    %1773 = vmatpush1.bf16.msra.mxu0 %v1169
    %1774 = vmatprep.subr.bf16.mxu0 %v1174
    %1775 = vmatpush1.bf16.msra.mxu0 %v1173
    %1776 = vmatprep.subr.bf16.mxu0 %v1178
    %1777 = vmatpush1.bf16.msra.mxu0 %v1177
    %1778 = vmatprep.subr.bf16.mxu0 %v1182
    %1779 = vmatpush1.bf16.msra.mxu0 %v1181
    %1780 = vmatprep.subr.bf16.mxu0 %v1186
    %1781 = vmatpush1.bf16.msra.mxu0 %v1185
    %1782 = vmatprep.subr.bf16.mxu0 %v1190
    %1783 = vmatpush1.bf16.msra.mxu0 %v1189
    %1784 = vmatprep.mubr.bf16.mxu0 %v334
    %1785 = vmatmul.mubr.bf16.gmra.mrb[0].mxu0 %v332
    %v1786 = vpop.f32.mrb[0].mxu0
    %v1787 = vadd.f32 %v1746, %v1786
    %v1788 = vpop.f32.mrb[0].mxu0
    %v1789 = vadd.f32 %v1748, %v1788
    %v1790 = vpop.f32.mrb[0].mxu0
    %v1791 = vpop.f32.mrb[0].mxu0
    %1792 = vdwg.mxu0
    %1793 = vmatprep.subr.bf16.mxu0 %v1194
    %1794 = vmatpush1.bf16.msra.mxu0 %v1193
    %1795 = vmatprep.subr.bf16.mxu0 %v1198
    %1796 = vmatpush1.bf16.msra.mxu0 %v1197
    %1797 = vmatprep.subr.bf16.mxu0 %v1202
    %1798 = vmatpush1.bf16.msra.mxu0 %v1201
    %1799 = vmatprep.subr.bf16.mxu0 %v1206
    %1800 = vmatpush1.bf16.msra.mxu0 %v1205
    %1801 = vmatprep.subr.bf16.mxu0 %v1210
    %1802 = vmatpush1.bf16.msra.mxu0 %v1209
    %1803 = vmatprep.subr.bf16.mxu0 %v1214
    %1804 = vmatpush1.bf16.msra.mxu0 %v1213
    %1805 = vmatprep.subr.bf16.mxu0 %v1218
    %1806 = vmatpush1.bf16.msra.mxu0 %v1217
    %1807 = vmatprep.subr.bf16.mxu0 %v1222
    %1808 = vmatpush1.bf16.msra.mxu0 %v1221
    %1809 = vmatprep.subr.bf16.mxu0 %v1226
    %1810 = vmatpush1.bf16.msra.mxu0 %v1225
    %1811 = vmatprep.subr.bf16.mxu0 %v1230
    %1812 = vmatpush1.bf16.msra.mxu0 %v1229
    %1813 = vmatprep.subr.bf16.mxu0 %v1234
    %1814 = vmatpush1.bf16.msra.mxu0 %v1233
    %1815 = vmatprep.subr.bf16.mxu0 %v1238
    %1816 = vmatpush1.bf16.msra.mxu0 %v1237
    %1817 = vmatprep.subr.bf16.mxu0 %v1242
    %1818 = vmatpush1.bf16.msra.mxu0 %v1241
    %1819 = vmatprep.subr.bf16.mxu0 %v1246
    %1820 = vmatpush1.bf16.msra.mxu0 %v1245
    %1821 = vmatprep.subr.bf16.mxu0 %v1250
    %1822 = vmatpush1.bf16.msra.mxu0 %v1249
    %1823 = vmatprep.subr.bf16.mxu0 %v1254
    %1824 = vmatpush1.bf16.msra.mxu0 %v1253
    %1825 = vmatprep.mubr.bf16.mxu0 %v331
    %1826 = vmatmul.mubr.bf16.gmra.mrb[0].mxu0 %v317
    %v1827 = vpop.f32.mrb[0].mxu0
    %v1828 = vadd.f32 %v1787, %v1827
    %v1829 = vpop.f32.mrb[0].mxu0
    %v1830 = vadd.f32 %v1789, %v1829
    %v1831 = vpop.f32.mrb[0].mxu0
    %v1832 = vpop.f32.mrb[0].mxu0
    %1833 = vdwg.mxu0
    %1834 = vmatprep.subr.bf16.mxu0 %v1258
    %1835 = vmatpush1.bf16.msra.mxu0 %v1257
    %1836 = vmatprep.subr.bf16.mxu0 %v1262
    %1837 = vmatpush1.bf16.msra.mxu0 %v1261
    %1838 = vmatprep.subr.bf16.mxu0 %v1266
    %1839 = vmatpush1.bf16.msra.mxu0 %v1265
    %1840 = vmatprep.subr.bf16.mxu0 %v1270
    %1841 = vmatpush1.bf16.msra.mxu0 %v1269
    %1842 = vmatprep.subr.bf16.mxu0 %v1274
    %1843 = vmatpush1.bf16.msra.mxu0 %v1273
    %1844 = vmatprep.subr.bf16.mxu0 %v1278
    %1845 = vmatpush1.bf16.msra.mxu0 %v1277
    %1846 = vmatprep.subr.bf16.mxu0 %v1282
    %1847 = vmatpush1.bf16.msra.mxu0 %v1281
    %1848 = vmatprep.subr.bf16.mxu0 %v1286
    %1849 = vmatpush1.bf16.msra.mxu0 %v1285
    %1850 = vmatprep.subr.bf16.mxu0 %v1290
    %1851 = vmatpush1.bf16.msra.mxu0 %v1289
    %1852 = vmatprep.subr.bf16.mxu0 %v1294
    %1853 = vmatpush1.bf16.msra.mxu0 %v1293
    %1854 = vmatprep.subr.bf16.mxu0 %v1298
    %1855 = vmatpush1.bf16.msra.mxu0 %v1297
    %1856 = vmatprep.subr.bf16.mxu0 %v1302
    %1857 = vmatpush1.bf16.msra.mxu0 %v1301
    %1858 = vmatprep.subr.bf16.mxu0 0
    %1859 = vmatpush1.bf16.msra.mxu0 0
    %1860 = vmatprep.subr.bf16.mxu0 0
    %1861 = vmatpush1.bf16.msra.mxu0 0
    %1862 = vmatprep.subr.bf16.mxu0 0
    %1863 = vmatpush1.bf16.msra.mxu0 0
    %1864 = vmatprep.subr.bf16.mxu0 0
    %1865 = vmatpush1.bf16.msra.mxu0 0
    %1866 = vmatprep.mubr.bf16.mxu0 %v1545
    %1867 = vmatmul.mubr.bf16.gmra.mrb[0].mxu0 %v333
    %v1868 = vpop.f32.mrb[0].mxu0
    %v1869 = vadd.f32 %v1828, %v1868
    %v1870 = vpop.f32.mrb[0].mxu0
    %v1871 = vadd.f32 %v1830, %v1870
    %v1872 = vpop.f32.mrb[0].mxu0
    %v1873 = vpop.f32.mrb[0].mxu0
    %1874 = vdwg.mxu0
    %v1875 = vpack.c.bf16 %v1705, %v1705
    %v1876 = vpack.c.bf16 %v1707, %v1707
    %v1877 = vpack.c.bf16 %v1869, %v1869
    %v1878 = vpack.c.bf16 %v1871, %v1871
    %v1879 = vld [vmem:[%s2] sm:$0xff]
    %v1880 = vld [vmem:[%s2 + $0x8] sm:$0xff]
    %v1881 = vld [vmem:[%s2 + $0x10] sm:$0xff]
    %v1882 = vld [vmem:[%s2 + $0x18] sm:$0xff]
    %v1883 = vld [vmem:[%s2 + $0x20] sm:$0xff]
    %v1884 = vld [vmem:[%s2 + $0x28] sm:$0xff]
    %v1885 = vld [vmem:[%s2 + $0x30] sm:$0xff]
    %v1886 = vld [vmem:[%s2 + $0x38] sm:$0xff]
    %v1887 = vld [vmem:[%s2 + $0x40] sm:$0xff]
    %v1888 = vld [vmem:[%s2 + $0x48] sm:$0xff]
    %v1889 = vld [vmem:[%s2 + $0x50] sm:$0xff]
    %v1890 = vld [vmem:[%s2 + $0x58] sm:$0xff]
    %v1891 = vld [vmem:[%s2 + $0x60] sm:$0xff]
    %v1892 = vld [vmem:[%s2 + $0x68] sm:$0xff]
    %v1893 = vld [vmem:[%s2 + $0x70] sm:$0xff]
    %v1894 = vld [vmem:[%s2 + $0x78] sm:$0xff]
    %v1895 = vld [vmem:[%s2 + $0x80] sm:$0xff]
    %v1896 = vld [vmem:[%s2 + $0x88] sm:$0xff]
    %v1897 = vld [vmem:[%s2 + $0x90] sm:$0xff]
    %v1898 = vld [vmem:[%s2 + $0x98] sm:$0xff]
    %v1899 = vld [vmem:[%s2 + $0xa0] sm:$0xff]
    %v1900 = vld [vmem:[%s2 + $0xa8] sm:$0xff]
    %v1901 = vld [vmem:[%s2 + $0xb0] sm:$0xff]
    %v1902 = vld [vmem:[%s2 + $0xb8] sm:$0xff]
    %v1903 = vld [vmem:[%s2 + $0xc0] sm:$0xff]
    %v1904 = vld [vmem:[%s2 + $0xc8] sm:$0xff]
    %v1905 = vld [vmem:[%s2 + $0xd0] sm:$0xff]
    %v1906 = vld [vmem:[%s2 + $0xd8] sm:$0xff]
    %v1907 = vld [vmem:[%s2 + $0xe0] sm:$0xff]
    %v1908 = vld [vmem:[%s2 + $0xe8] sm:$0xff]
    %v1909 = vld [vmem:[%s2 + $0xf0] sm:$0xff]
    %v1910 = vld [vmem:[%s2 + $0xf8] sm:$0xff]
    %v1911 = vld [vmem:[%s2 + $0x100] sm:$0xff]
    %v1912 = vld [vmem:[%s2 + $0x108] sm:$0xff]
    %v1913 = vld [vmem:[%s2 + $0x110] sm:$0xff]
    %v1914 = vld [vmem:[%s2 + $0x118] sm:$0xff]
    %v1915 = vld [vmem:[%s2 + $0x120] sm:$0xff]
    %v1916 = vld [vmem:[%s2 + $0x128] sm:$0xff]
    %v1917 = vld [vmem:[%s2 + $0x130] sm:$0xff]
    %v1918 = vld [vmem:[%s2 + $0x138] sm:$0xff]
    %v1919 = vld [vmem:[%s2 + $0x140] sm:$0xff]
    %v1920 = vld [vmem:[%s2 + $0x148] sm:$0xff]
    %v1921 = vld [vmem:[%s2 + $0x150] sm:$0xff]
    %v1922 = vld [vmem:[%s2 + $0x158] sm:$0xff]
    %v1923 = vld [vmem:[%s2 + $0x160] sm:$0xff]
    %v1924 = vld [vmem:[%s2 + $0x168] sm:$0xff]
    %v1925 = vld [vmem:[%s2 + $0x170] sm:$0xff]
    %v1926 = vld [vmem:[%s2 + $0x178] sm:$0xff]
    %v1927 = vld [vmem:[%s2 + $0x180] sm:$0xff]
    %v1928 = vld [vmem:[%s2 + $0x188] sm:$0xff]
    %v1929 = vld [vmem:[%s2 + $0x190] sm:$0xff]
    %v1930 = vld [vmem:[%s2 + $0x198] sm:$0xff]
    %v1931 = vld [vmem:[%s2 + $0x1a0] sm:$0xff]
    %v1932 = vld [vmem:[%s2 + $0x1a8] sm:$0xff]
    %v1933 = vld [vmem:[%s2 + $0x1b0] sm:$0xff]
    %v1934 = vld [vmem:[%s2 + $0x1b8] sm:$0xff]
    %v1935 = vld [vmem:[%s2 + $0x1c0] sm:$0xff]
    %v1936 = vld [vmem:[%s2 + $0x1c8] sm:$0xff]
    %v1937 = vld [vmem:[%s2 + $0x1d0] sm:$0xff]
    %v1938 = vld [vmem:[%s2 + $0x1d8] sm:$0xff]
    %v1939 = vld [vmem:[%s2 + $0x1e0] sm:$0xff]
    %v1940 = vld [vmem:[%s2 + $0x1e8] sm:$0xff]
    %v1941 = vld [vmem:[%s2 + $0x1f0] sm:$0xff]
    %v1942 = vld [vmem:[%s2 + $0x1f8] sm:$0xff]
    %v1943 = vld [vmem:[%s2 + $0x200] sm:$0xff]
    %v1944 = vld [vmem:[%s2 + $0x208] sm:$0xff]
    %v1945 = vld [vmem:[%s2 + $0x210] sm:$0xff]
    %v1946 = vld [vmem:[%s2 + $0x218] sm:$0xff]
    %v1947 = vld [vmem:[%s2 + $0x220] sm:$0xff]
    %v1948 = vld [vmem:[%s2 + $0x228] sm:$0xff]
    %v1949 = vld [vmem:[%s2 + $0x230] sm:$0xff]
    %v1950 = vld [vmem:[%s2 + $0x238] sm:$0xff]
    %v1951 = vld [vmem:[%s2 + $0x240] sm:$0xff]
    %v1952 = vld [vmem:[%s2 + $0x248] sm:$0xff]
    %v1953 = vld [vmem:[%s2 + $0x250] sm:$0xff]
    %v1954 = vld [vmem:[%s2 + $0x258] sm:$0xff]
    %v1955 = vld [vmem:[%s2 + $0x260] sm:$0xff]
    %v1956 = vld [vmem:[%s2 + $0x268] sm:$0xff]
    %v1957 = vld [vmem:[%s2 + $0x270] sm:$0xff]
    %v1958 = vld [vmem:[%s2 + $0x278] sm:$0xff]
    %v1959 = vld [vmem:[%s2 + $0x280] sm:$0xff]
    %v1960 = vld [vmem:[%s2 + $0x288] sm:$0xff]
    %v1961 = vld [vmem:[%s2 + $0x290] sm:$0xff]
    %v1962 = vld [vmem:[%s2 + $0x298] sm:$0xff]
    %v1963 = vld [vmem:[%s2 + $0x2a0] sm:$0xff]
    %v1964 = vld [vmem:[%s2 + $0x2a8] sm:$0xff]
    %v1965 = vld [vmem:[%s2 + $0x2b0] sm:$0xff]
    %v1966 = vld [vmem:[%s2 + $0x2b8] sm:$0xff]
    %v1967 = vld [vmem:[%s2 + $0x2c0] sm:$0xff]
    %v1968 = vld [vmem:[%s2 + $0x2c8] sm:$0xff]
    %v1969 = vld [vmem:[%s2 + $0x2d0] sm:$0xff]
    %v1970 = vld [vmem:[%s2 + $0x2d8] sm:$0xff]
    %v1971 = vld [vmem:[%s2 + $0x2e0] sm:$0xff]
    %v1972 = vld [vmem:[%s2 + $0x2e8] sm:$0xff]
    %v1973 = vld [vmem:[%s2 + $0x2f0] sm:$0xff]
    %v1974 = vld [vmem:[%s2 + $0x2f8] sm:$0xff]
    %v1975 = vld [vmem:[%s2 + $0x300] sm:$0xff]
    %v1976 = vld [vmem:[%s2 + $0x308] sm:$0xff]
    %v1977 = vld [vmem:[%s2 + $0x310] sm:$0xff]
    %v1978 = vld [vmem:[%s2 + $0x318] sm:$0xff]
    %v1979 = vld [vmem:[%s2 + $0x320] sm:$0xff]
    %v1980 = vld [vmem:[%s2 + $0x328] sm:$0xff]
    %v1981 = vld [vmem:[%s2 + $0x330] sm:$0xff]
    %v1982 = vld [vmem:[%s2 + $0x338] sm:$0xff]
    %v1983 = vld [vmem:[%s2 + $0x340] sm:$0xff]
    %v1984 = vld [vmem:[%s2 + $0x348] sm:$0xff]
    %v1985 = vld [vmem:[%s2 + $0x350] sm:$0xff]
    %v1986 = vld [vmem:[%s2 + $0x358] sm:$0xff]
    %v1987 = vld [vmem:[%s2 + $0x360] sm:$0xff]
    %v1988 = vld [vmem:[%s2 + $0x368] sm:$0xff]
    %v1989 = vld [vmem:[%s2 + $0x370] sm:$0xff]
    %v1990 = vld [vmem:[%s2 + $0x378] sm:$0xff]
    %v1991 = vld [vmem:[%s2 + $0x380] sm:$0xff]
    %v1992 = vld [vmem:[%s2 + $0x388] sm:$0xff]
    %v1993 = vld [vmem:[%s2 + $0x390] sm:$0xff]
    %v1994 = vld [vmem:[%s2 + $0x398] sm:$0xff]
    %v1995 = vld [vmem:[%s2 + $0x3a0] sm:$0xff]
    %v1996 = vld [vmem:[%s2 + $0x3a8] sm:$0xff]
    %v1997 = vld [vmem:[%s2 + $0x3b0] sm:$0xff]
    %v1998 = vld [vmem:[%s2 + $0x3b8] sm:$0xff]
    %v1999 = vld [vmem:[%s2 + $0x3c0] sm:$0xff]
    %v2000 = vld [vmem:[%s2 + $0x3c8] sm:$0xff]
    %v2001 = vld [vmem:[%s2 + $0x3d0] sm:$0xff]
    %v2002 = vld [vmem:[%s2 + $0x3d8] sm:$0xff]
    %v2003 = vld [vmem:[%s2 + $0x3e0] sm:$0xff]
    %v2004 = vld [vmem:[%s2 + $0x3e8] sm:$0xff]
    %v2005 = vld [vmem:[%s2 + $0x3f0] sm:$0xff]
    %v2006 = vld [vmem:[%s2 + $0x3f8] sm:$0xff]
    %v2007 = vld [vmem:[%s3] sm:$0xf]
    %v2009 = vlaneseq
    %v2010 = vshrl.u32 %v2009, 7
    %v2011 = vsub.s32 0, %v2010
    %v2012 = vrot.slane %v2007, %v2011
    %v2013 = vlaneseq
    %v2014 = vshrl.u32 %v2013, 7
    %v2015 = vsub.s32 1, %v2014
    %v2016 = vrot.slane %v2007, %v2015
    %v2017 = vlaneseq
    %v2018 = vshrl.u32 %v2017, 7
    %v2019 = vsub.s32 2, %v2018
    %v2020 = vrot.slane %v2007, %v2019
    %v2021 = vlaneseq
    %v2022 = vshrl.u32 %v2021, 7
    %v2023 = vsub.s32 3, %v2022
    %v2024 = vrot.slane %v2007, %v2023
    %v2157 = vunpack.c.l.b16 %v1879
    %v2158 = vunpack.c.h.b16 %v1879
    %v2159 = vunpack.c.l.b16 %v1880
    %v2160 = vunpack.c.h.b16 %v1880
    %v2161 = vunpack.c.l.b16 %v1881
    %v2162 = vunpack.c.h.b16 %v1881
    %v2163 = vunpack.c.l.b16 %v1882
    %v2164 = vunpack.c.h.b16 %v1882
    %v2165 = vunpack.c.l.b16 %v1883
    %v2166 = vunpack.c.h.b16 %v1883
    %v2167 = vunpack.c.l.b16 %v1884
    %v2168 = vunpack.c.h.b16 %v1884
    %v2169 = vunpack.c.l.b16 %v1885
    %v2170 = vunpack.c.h.b16 %v1885
    %v2171 = vunpack.c.l.b16 %v1886
    %v2172 = vunpack.c.h.b16 %v1886
    %v2173 = vunpack.c.l.b16 %v1887
    %v2174 = vunpack.c.h.b16 %v1887
    %v2175 = vunpack.c.l.b16 %v1888
    %v2176 = vunpack.c.h.b16 %v1888
    %v2177 = vunpack.c.l.b16 %v1889
    %v2178 = vunpack.c.h.b16 %v1889
    %v2179 = vunpack.c.l.b16 %v1890
    %v2180 = vunpack.c.h.b16 %v1890
    %v2181 = vunpack.c.l.b16 %v1891
    %v2182 = vunpack.c.h.b16 %v1891
    %v2183 = vunpack.c.l.b16 %v1892
    %v2184 = vunpack.c.h.b16 %v1892
    %v2185 = vunpack.c.l.b16 %v1893
    %v2186 = vunpack.c.h.b16 %v1893
    %v2187 = vunpack.c.l.b16 %v1894
    %v2188 = vunpack.c.h.b16 %v1894
    %v2189 = vunpack.c.l.b16 %v1895
    %v2190 = vunpack.c.h.b16 %v1895
    %v2191 = vunpack.c.l.b16 %v1896
    %v2192 = vunpack.c.h.b16 %v1896
    %v2193 = vunpack.c.l.b16 %v1897
    %v2194 = vunpack.c.h.b16 %v1897
    %v2195 = vunpack.c.l.b16 %v1898
    %v2196 = vunpack.c.h.b16 %v1898
    %v2197 = vunpack.c.l.b16 %v1899
    %v2198 = vunpack.c.h.b16 %v1899
    %v2199 = vunpack.c.l.b16 %v1900
    %v2200 = vunpack.c.h.b16 %v1900
    %v2201 = vunpack.c.l.b16 %v1901
    %v2202 = vunpack.c.h.b16 %v1901
    %v2203 = vunpack.c.l.b16 %v1902
    %v2204 = vunpack.c.h.b16 %v1902
    %v2205 = vunpack.c.l.b16 %v1903
    %v2206 = vunpack.c.h.b16 %v1903
    %v2207 = vunpack.c.l.b16 %v1904
    %v2208 = vunpack.c.h.b16 %v1904
    %v2209 = vunpack.c.l.b16 %v1905
    %v2210 = vunpack.c.h.b16 %v1905
    %v2211 = vunpack.c.l.b16 %v1906
    %v2212 = vunpack.c.h.b16 %v1906
    %v2213 = vunpack.c.l.b16 %v1907
    %v2214 = vunpack.c.h.b16 %v1907
    %v2215 = vunpack.c.l.b16 %v1908
    %v2216 = vunpack.c.h.b16 %v1908
    %v2217 = vunpack.c.l.b16 %v1909
    %v2218 = vunpack.c.h.b16 %v1909
    %v2219 = vunpack.c.l.b16 %v1910
    %v2220 = vunpack.c.h.b16 %v1910
    %v2221 = vunpack.c.l.b16 %v1911
    %v2222 = vunpack.c.h.b16 %v1911
    %v2223 = vunpack.c.l.b16 %v1912
    %v2224 = vunpack.c.h.b16 %v1912
    %v2225 = vunpack.c.l.b16 %v1913
    %v2226 = vunpack.c.h.b16 %v1913
    %v2227 = vunpack.c.l.b16 %v1914
    %v2228 = vunpack.c.h.b16 %v1914
    %v2229 = vunpack.c.l.b16 %v1915
    %v2230 = vunpack.c.h.b16 %v1915
    %v2231 = vunpack.c.l.b16 %v1916
    %v2232 = vunpack.c.h.b16 %v1916
    %v2233 = vunpack.c.l.b16 %v1917
    %v2234 = vunpack.c.h.b16 %v1917
    %v2235 = vunpack.c.l.b16 %v1918
    %v2236 = vunpack.c.h.b16 %v1918
    %v2237 = vunpack.c.l.b16 %v1919
    %v2238 = vunpack.c.h.b16 %v1919
    %v2239 = vunpack.c.l.b16 %v1920
    %v2240 = vunpack.c.h.b16 %v1920
    %v2241 = vunpack.c.l.b16 %v1921
    %v2242 = vunpack.c.h.b16 %v1921
    %v2243 = vunpack.c.l.b16 %v1922
    %v2244 = vunpack.c.h.b16 %v1922
    %v2245 = vunpack.c.l.b16 %v1923
    %v2246 = vunpack.c.h.b16 %v1923
    %v2247 = vunpack.c.l.b16 %v1924
    %v2248 = vunpack.c.h.b16 %v1924
    %v2249 = vunpack.c.l.b16 %v1925
    %v2250 = vunpack.c.h.b16 %v1925
    %v2251 = vunpack.c.l.b16 %v1926
    %v2252 = vunpack.c.h.b16 %v1926
    %v2253 = vunpack.c.l.b16 %v1927
    %v2254 = vunpack.c.h.b16 %v1927
    %v2255 = vunpack.c.l.b16 %v1928
    %v2256 = vunpack.c.h.b16 %v1928
    %v2257 = vunpack.c.l.b16 %v1929
    %v2258 = vunpack.c.h.b16 %v1929
    %v2259 = vunpack.c.l.b16 %v1930
    %v2260 = vunpack.c.h.b16 %v1930
    %v2261 = vunpack.c.l.b16 %v1931
    %v2262 = vunpack.c.h.b16 %v1931
    %v2263 = vunpack.c.l.b16 %v1932
    %v2264 = vunpack.c.h.b16 %v1932
    %v2265 = vunpack.c.l.b16 %v1933
    %v2266 = vunpack.c.h.b16 %v1933
    %v2267 = vunpack.c.l.b16 %v1934
    %v2268 = vunpack.c.h.b16 %v1934
    %v2269 = vunpack.c.l.b16 %v1935
    %v2270 = vunpack.c.h.b16 %v1935
    %v2271 = vunpack.c.l.b16 %v1936
    %v2272 = vunpack.c.h.b16 %v1936
    %v2273 = vunpack.c.l.b16 %v1937
    %v2274 = vunpack.c.h.b16 %v1937
    %v2275 = vunpack.c.l.b16 %v1938
    %v2276 = vunpack.c.h.b16 %v1938
    %v2277 = vunpack.c.l.b16 %v1939
    %v2278 = vunpack.c.h.b16 %v1939
    %v2279 = vunpack.c.l.b16 %v1940
    %v2280 = vunpack.c.h.b16 %v1940
    %v2281 = vunpack.c.l.b16 %v1941
    %v2282 = vunpack.c.h.b16 %v1941
    %v2283 = vunpack.c.l.b16 %v1942
    %v2284 = vunpack.c.h.b16 %v1942
    %v2285 = vunpack.c.l.b16 %v1943
    %v2286 = vunpack.c.h.b16 %v1943
    %v2287 = vunpack.c.l.b16 %v1944
    %v2288 = vunpack.c.h.b16 %v1944
    %v2289 = vunpack.c.l.b16 %v1945
    %v2290 = vunpack.c.h.b16 %v1945
    %v2291 = vunpack.c.l.b16 %v1946
    %v2292 = vunpack.c.h.b16 %v1946
    %v2293 = vunpack.c.l.b16 %v1947
    %v2294 = vunpack.c.h.b16 %v1947
    %v2295 = vunpack.c.l.b16 %v1948
    %v2296 = vunpack.c.h.b16 %v1948
    %v2297 = vunpack.c.l.b16 %v1949
    %v2298 = vunpack.c.h.b16 %v1949
    %v2299 = vunpack.c.l.b16 %v1950
    %v2300 = vunpack.c.h.b16 %v1950
    %v2301 = vunpack.c.l.b16 %v1951
    %v2302 = vunpack.c.h.b16 %v1951
    %v2303 = vunpack.c.l.b16 %v1952
    %v2304 = vunpack.c.h.b16 %v1952
    %v2305 = vunpack.c.l.b16 %v1953
    %v2306 = vunpack.c.h.b16 %v1953
    %v2307 = vunpack.c.l.b16 %v1954
    %v2308 = vunpack.c.h.b16 %v1954
    %v2309 = vunpack.c.l.b16 %v1955
    %v2310 = vunpack.c.h.b16 %v1955
    %v2311 = vunpack.c.l.b16 %v1956
    %v2312 = vunpack.c.h.b16 %v1956
    %v2313 = vunpack.c.l.b16 %v1957
    %v2314 = vunpack.c.h.b16 %v1957
    %v2315 = vunpack.c.l.b16 %v1958
    %v2316 = vunpack.c.h.b16 %v1958
    %v2317 = vunpack.c.l.b16 %v1959
    %v2318 = vunpack.c.h.b16 %v1959
    %v2319 = vunpack.c.l.b16 %v1960
    %v2320 = vunpack.c.h.b16 %v1960
    %v2321 = vunpack.c.l.b16 %v1961
    %v2322 = vunpack.c.h.b16 %v1961
    %v2323 = vunpack.c.l.b16 %v1962
    %v2324 = vunpack.c.h.b16 %v1962
    %v2325 = vunpack.c.l.b16 %v1963
    %v2326 = vunpack.c.h.b16 %v1963
    %v2327 = vunpack.c.l.b16 %v1964
    %v2328 = vunpack.c.h.b16 %v1964
    %v2329 = vunpack.c.l.b16 %v1965
    %v2330 = vunpack.c.h.b16 %v1965
    %v2331 = vunpack.c.l.b16 %v1966
    %v2332 = vunpack.c.h.b16 %v1966
    %v2333 = vunpack.c.l.b16 %v1967
    %v2334 = vunpack.c.h.b16 %v1967
    %v2335 = vunpack.c.l.b16 %v1968
    %v2336 = vunpack.c.h.b16 %v1968
    %v2337 = vunpack.c.l.b16 %v1969
    %v2338 = vunpack.c.h.b16 %v1969
    %v2339 = vunpack.c.l.b16 %v1970
    %v2340 = vunpack.c.h.b16 %v1970
    %v2341 = vunpack.c.l.b16 %v1971
    %v2342 = vunpack.c.h.b16 %v1971
    %v2343 = vunpack.c.l.b16 %v1972
    %v2344 = vunpack.c.h.b16 %v1972
    %v2345 = vunpack.c.l.b16 %v1973
    %v2346 = vunpack.c.h.b16 %v1973
    %v2347 = vunpack.c.l.b16 %v1974
    %v2348 = vunpack.c.h.b16 %v1974
    %v2349 = vunpack.c.l.b16 %v1975
    %v2350 = vunpack.c.h.b16 %v1975
    %v2351 = vunpack.c.l.b16 %v1976
    %v2352 = vunpack.c.h.b16 %v1976
    %v2353 = vunpack.c.l.b16 %v1977
    %v2354 = vunpack.c.h.b16 %v1977
    %v2355 = vunpack.c.l.b16 %v1978
    %v2356 = vunpack.c.h.b16 %v1978
    %v2357 = vunpack.c.l.b16 %v1979
    %v2358 = vunpack.c.h.b16 %v1979
    %v2359 = vunpack.c.l.b16 %v1980
    %v2360 = vunpack.c.h.b16 %v1980
    %v2361 = vunpack.c.l.b16 %v1981
    %v2362 = vunpack.c.h.b16 %v1981
    %v2363 = vunpack.c.l.b16 %v1982
    %v2364 = vunpack.c.h.b16 %v1982
    %v2365 = vunpack.c.l.b16 %v1983
    %v2366 = vunpack.c.h.b16 %v1983
    %v2367 = vunpack.c.l.b16 %v1984
    %v2368 = vunpack.c.h.b16 %v1984
    %v2369 = vunpack.c.l.b16 %v1985
    %v2370 = vunpack.c.h.b16 %v1985
    %v2371 = vunpack.c.l.b16 %v1986
    %v2372 = vunpack.c.h.b16 %v1986
    %v2373 = vunpack.c.l.b16 %v1987
    %v2374 = vunpack.c.h.b16 %v1987
    %v2375 = vunpack.c.l.b16 %v1988
    %v2376 = vunpack.c.h.b16 %v1988
    %v2377 = vunpack.c.l.b16 %v1989
    %v2378 = vunpack.c.h.b16 %v1989
    %v2379 = vunpack.c.l.b16 %v1990
    %v2380 = vunpack.c.h.b16 %v1990
    %v2381 = vunpack.c.l.b16 %v1991
    %v2382 = vunpack.c.h.b16 %v1991
    %v2383 = vunpack.c.l.b16 %v1992
    %v2384 = vunpack.c.h.b16 %v1992
    %v2385 = vunpack.c.l.b16 %v1993
    %v2386 = vunpack.c.h.b16 %v1993
    %v2387 = vunpack.c.l.b16 %v1994
    %v2388 = vunpack.c.h.b16 %v1994
    %v2389 = vunpack.c.l.b16 %v1995
    %v2390 = vunpack.c.h.b16 %v1995
    %v2391 = vunpack.c.l.b16 %v1996
    %v2392 = vunpack.c.h.b16 %v1996
    %v2393 = vunpack.c.l.b16 %v1997
    %v2394 = vunpack.c.h.b16 %v1997
    %v2395 = vunpack.c.l.b16 %v1998
    %v2396 = vunpack.c.h.b16 %v1998
    %v2397 = vunpack.c.l.b16 %v1999
    %v2398 = vunpack.c.h.b16 %v1999
    %v2399 = vunpack.c.l.b16 %v2000
    %v2400 = vunpack.c.h.b16 %v2000
    %v2401 = vunpack.c.l.b16 %v2001
    %v2402 = vunpack.c.h.b16 %v2001
    %v2403 = vunpack.c.l.b16 %v2002
    %v2404 = vunpack.c.h.b16 %v2002
    %v2405 = vunpack.c.l.b16 %v2003
    %v2406 = vunpack.c.h.b16 %v2003
    %v2407 = vunpack.c.l.b16 %v2004
    %v2408 = vunpack.c.h.b16 %v2004
    %v2409 = vunpack.c.l.b16 %v2005
    %v2410 = vunpack.c.h.b16 %v2005
    %v2411 = vunpack.c.l.b16 %v2006
    %v2412 = vunpack.c.h.b16 %v2006
    %v2413 = vpack.c.b16 %v2161, %v2157
    %v2414 = vpack.c.b16 %v2162, %v2158
    %v2415 = vpack.c.b16 %v2163, %v2159
    %v2416 = vpack.c.b16 %v2164, %v2160
    %v2417 = vpack.c.b16 %v2169, %v2165
    %v2418 = vpack.c.b16 %v2170, %v2166
    %v2419 = vpack.c.b16 %v2171, %v2167
    %v2420 = vpack.c.b16 %v2172, %v2168
    %v2421 = vpack.c.b16 %v2177, %v2173
    %v2422 = vpack.c.b16 %v2178, %v2174
    %v2423 = vpack.c.b16 %v2179, %v2175
    %v2424 = vpack.c.b16 %v2180, %v2176
    %v2425 = vpack.c.b16 %v2185, %v2181
    %v2426 = vpack.c.b16 %v2186, %v2182
    %v2427 = vpack.c.b16 %v2187, %v2183
    %v2428 = vpack.c.b16 %v2188, %v2184
    %v2429 = vpack.c.b16 %v2193, %v2189
    %v2430 = vpack.c.b16 %v2194, %v2190
    %v2431 = vpack.c.b16 %v2195, %v2191
    %v2432 = vpack.c.b16 %v2196, %v2192
    %v2433 = vpack.c.b16 %v2201, %v2197
    %v2434 = vpack.c.b16 %v2202, %v2198
    %v2435 = vpack.c.b16 %v2203, %v2199
    %v2436 = vpack.c.b16 %v2204, %v2200
    %v2437 = vpack.c.b16 %v2209, %v2205
    %v2438 = vpack.c.b16 %v2210, %v2206
    %v2439 = vpack.c.b16 %v2211, %v2207
    %v2440 = vpack.c.b16 %v2212, %v2208
    %v2441 = vpack.c.b16 %v2217, %v2213
    %v2442 = vpack.c.b16 %v2218, %v2214
    %v2443 = vpack.c.b16 %v2219, %v2215
    %v2444 = vpack.c.b16 %v2220, %v2216
    %v2445 = vpack.c.b16 %v2225, %v2221
    %v2446 = vpack.c.b16 %v2226, %v2222
    %v2447 = vpack.c.b16 %v2227, %v2223
    %v2448 = vpack.c.b16 %v2228, %v2224
    %v2449 = vpack.c.b16 %v2233, %v2229
    %v2450 = vpack.c.b16 %v2234, %v2230
    %v2451 = vpack.c.b16 %v2235, %v2231
    %v2452 = vpack.c.b16 %v2236, %v2232
    %v2453 = vpack.c.b16 %v2241, %v2237
    %v2454 = vpack.c.b16 %v2242, %v2238
    %v2455 = vpack.c.b16 %v2243, %v2239
    %v2456 = vpack.c.b16 %v2244, %v2240
    %v2457 = vpack.c.b16 %v2249, %v2245
    %v2458 = vpack.c.b16 %v2250, %v2246
    %v2459 = vpack.c.b16 %v2251, %v2247
    %v2460 = vpack.c.b16 %v2252, %v2248
    %v2461 = vpack.c.b16 %v2257, %v2253
    %v2462 = vpack.c.b16 %v2258, %v2254
    %v2463 = vpack.c.b16 %v2259, %v2255
    %v2464 = vpack.c.b16 %v2260, %v2256
    %v2465 = vpack.c.b16 %v2265, %v2261
    %v2466 = vpack.c.b16 %v2266, %v2262
    %v2467 = vpack.c.b16 %v2267, %v2263
    %v2468 = vpack.c.b16 %v2268, %v2264
    %v2469 = vpack.c.b16 %v2273, %v2269
    %v2470 = vpack.c.b16 %v2274, %v2270
    %v2471 = vpack.c.b16 %v2275, %v2271
    %v2472 = vpack.c.b16 %v2276, %v2272
    %v2473 = vpack.c.b16 %v2281, %v2277
    %v2474 = vpack.c.b16 %v2282, %v2278
    %v2475 = vpack.c.b16 %v2283, %v2279
    %v2476 = vpack.c.b16 %v2284, %v2280
    %v2477 = vpack.c.b16 %v2289, %v2285
    %v2478 = vpack.c.b16 %v2290, %v2286
    %v2479 = vpack.c.b16 %v2291, %v2287
    %v2480 = vpack.c.b16 %v2292, %v2288
    %v2481 = vpack.c.b16 %v2297, %v2293
    %v2482 = vpack.c.b16 %v2298, %v2294
    %v2483 = vpack.c.b16 %v2299, %v2295
    %v2484 = vpack.c.b16 %v2300, %v2296
    %v2485 = vpack.c.b16 %v2305, %v2301
    %v2486 = vpack.c.b16 %v2306, %v2302
    %v2487 = vpack.c.b16 %v2307, %v2303
    %v2488 = vpack.c.b16 %v2308, %v2304
    %v2489 = vpack.c.b16 %v2313, %v2309
    %v2490 = vpack.c.b16 %v2314, %v2310
    %v2491 = vpack.c.b16 %v2315, %v2311
    %v2492 = vpack.c.b16 %v2316, %v2312
    %v2493 = vpack.c.b16 %v2321, %v2317
    %v2494 = vpack.c.b16 %v2322, %v2318
    %v2495 = vpack.c.b16 %v2323, %v2319
    %v2496 = vpack.c.b16 %v2324, %v2320
    %v2497 = vpack.c.b16 %v2329, %v2325
    %v2498 = vpack.c.b16 %v2330, %v2326
    %v2499 = vpack.c.b16 %v2331, %v2327
    %v2500 = vpack.c.b16 %v2332, %v2328
    %v2501 = vpack.c.b16 %v2337, %v2333
    %v2502 = vpack.c.b16 %v2338, %v2334
    %v2503 = vpack.c.b16 %v2339, %v2335
    %v2504 = vpack.c.b16 %v2340, %v2336
    %v2505 = vpack.c.b16 %v2345, %v2341
    %v2506 = vpack.c.b16 %v2346, %v2342
    %v2507 = vpack.c.b16 %v2347, %v2343
    %v2508 = vpack.c.b16 %v2348, %v2344
    %v2509 = vpack.c.b16 %v2353, %v2349
    %v2510 = vpack.c.b16 %v2354, %v2350
    %v2511 = vpack.c.b16 %v2355, %v2351
    %v2512 = vpack.c.b16 %v2356, %v2352
    %v2513 = vpack.c.b16 %v2361, %v2357
    %v2514 = vpack.c.b16 %v2362, %v2358
    %v2515 = vpack.c.b16 %v2363, %v2359
    %v2516 = vpack.c.b16 %v2364, %v2360
    %v2517 = vpack.c.b16 %v2369, %v2365
    %v2518 = vpack.c.b16 %v2370, %v2366
    %v2519 = vpack.c.b16 %v2371, %v2367
    %v2520 = vpack.c.b16 %v2372, %v2368
    %v2521 = vpack.c.b16 %v2377, %v2373
    %v2522 = vpack.c.b16 %v2378, %v2374
    %v2523 = vpack.c.b16 %v2379, %v2375
    %v2524 = vpack.c.b16 %v2380, %v2376
    %v2525 = vpack.c.b16 %v2385, %v2381
    %v2526 = vpack.c.b16 %v2386, %v2382
    %v2527 = vpack.c.b16 %v2387, %v2383
    %v2528 = vpack.c.b16 %v2388, %v2384
    %v2529 = vpack.c.b16 %v2393, %v2389
    %v2530 = vpack.c.b16 %v2394, %v2390
    %v2531 = vpack.c.b16 %v2395, %v2391
    %v2532 = vpack.c.b16 %v2396, %v2392
    %v2533 = vpack.c.b16 %v2401, %v2397
    %v2534 = vpack.c.b16 %v2402, %v2398
    %v2535 = vpack.c.b16 %v2403, %v2399
    %v2536 = vpack.c.b16 %v2404, %v2400
    %v2537 = vpack.c.b16 %v2409, %v2405
    %v2538 = vpack.c.b16 %v2410, %v2406
    %v2539 = vpack.c.b16 %v2411, %v2407
    %v2540 = vpack.c.b16 %v2412, %v2408
    %2669 = vmatprep.subr.bf16.mxu0 %v2414
    %2670 = vmatpush1.bf16.msra.mxu0 %v2413
    %2671 = vmatprep.subr.bf16.mxu0 %v2418
    %2672 = vmatpush1.bf16.msra.mxu0 %v2417
    %2673 = vmatprep.subr.bf16.mxu0 %v2422
    %2674 = vmatpush1.bf16.msra.mxu0 %v2421
    %2675 = vmatprep.subr.bf16.mxu0 %v2426
    %2676 = vmatpush1.bf16.msra.mxu0 %v2425
    %2677 = vmatprep.subr.bf16.mxu0 %v2430
    %2678 = vmatpush1.bf16.msra.mxu0 %v2429
    %2679 = vmatprep.subr.bf16.mxu0 %v2434
    %2680 = vmatpush1.bf16.msra.mxu0 %v2433
    %2681 = vmatprep.subr.bf16.mxu0 %v2438
    %2682 = vmatpush1.bf16.msra.mxu0 %v2437
    %2683 = vmatprep.subr.bf16.mxu0 %v2442
    %2684 = vmatpush1.bf16.msra.mxu0 %v2441
    %2685 = vmatprep.subr.bf16.mxu0 %v2446
    %2686 = vmatpush1.bf16.msra.mxu0 %v2445
    %2687 = vmatprep.subr.bf16.mxu0 %v2450
    %2688 = vmatpush1.bf16.msra.mxu0 %v2449
    %2689 = vmatprep.subr.bf16.mxu0 %v2454
    %2690 = vmatpush1.bf16.msra.mxu0 %v2453
    %2691 = vmatprep.subr.bf16.mxu0 %v2458
    %2692 = vmatpush1.bf16.msra.mxu0 %v2457
    %2693 = vmatprep.subr.bf16.mxu0 %v2462
    %2694 = vmatpush1.bf16.msra.mxu0 %v2461
    %2695 = vmatprep.subr.bf16.mxu0 %v2466
    %2696 = vmatpush1.bf16.msra.mxu0 %v2465
    %2697 = vmatprep.subr.bf16.mxu0 %v2470
    %2698 = vmatpush1.bf16.msra.mxu0 %v2469
    %2699 = vmatprep.subr.bf16.mxu0 %v2474
    %2700 = vmatpush1.bf16.msra.mxu0 %v2473
    %2701 = vmatprep.mubr.bf16.mxu0 %v1876
    %2702 = vmatmul.mubr.bf16.gmra.mrb[0].mxu0 %v1875
    %v2703 = vpop.f32.mrb[0].mxu0
    %v2704 = vadd.f32 %v2012, %v2703
    %v2705 = vpop.f32.mrb[0].mxu0
    %v2706 = vadd.f32 %v2016, %v2705
    %v2707 = vpop.f32.mrb[0].mxu0
    %v2708 = vpop.f32.mrb[0].mxu0
    %2709 = vdwg.mxu0
    %2710 = vmatprep.subr.bf16.mxu0 %v2478
    %2711 = vmatpush1.bf16.msra.mxu0 %v2477
    %2712 = vmatprep.subr.bf16.mxu0 %v2482
    %2713 = vmatpush1.bf16.msra.mxu0 %v2481
    %2714 = vmatprep.subr.bf16.mxu0 %v2486
    %2715 = vmatpush1.bf16.msra.mxu0 %v2485
    %2716 = vmatprep.subr.bf16.mxu0 %v2490
    %2717 = vmatpush1.bf16.msra.mxu0 %v2489
    %2718 = vmatprep.subr.bf16.mxu0 %v2494
    %2719 = vmatpush1.bf16.msra.mxu0 %v2493
    %2720 = vmatprep.subr.bf16.mxu0 %v2498
    %2721 = vmatpush1.bf16.msra.mxu0 %v2497
    %2722 = vmatprep.subr.bf16.mxu0 %v2502
    %2723 = vmatpush1.bf16.msra.mxu0 %v2501
    %2724 = vmatprep.subr.bf16.mxu0 %v2506
    %2725 = vmatpush1.bf16.msra.mxu0 %v2505
    %2726 = vmatprep.subr.bf16.mxu0 %v2510
    %2727 = vmatpush1.bf16.msra.mxu0 %v2509
    %2728 = vmatprep.subr.bf16.mxu0 %v2514
    %2729 = vmatpush1.bf16.msra.mxu0 %v2513
    %2730 = vmatprep.subr.bf16.mxu0 %v2518
    %2731 = vmatpush1.bf16.msra.mxu0 %v2517
    %2732 = vmatprep.subr.bf16.mxu0 %v2522
    %2733 = vmatpush1.bf16.msra.mxu0 %v2521
    %2734 = vmatprep.subr.bf16.mxu0 %v2526
    %2735 = vmatpush1.bf16.msra.mxu0 %v2525
    %2736 = vmatprep.subr.bf16.mxu0 %v2530
    %2737 = vmatpush1.bf16.msra.mxu0 %v2529
    %2738 = vmatprep.subr.bf16.mxu0 %v2534
    %2739 = vmatpush1.bf16.msra.mxu0 %v2533
    %2740 = vmatprep.subr.bf16.mxu0 %v2538
    %2741 = vmatpush1.bf16.msra.mxu0 %v2537
    %2742 = vmatprep.mubr.bf16.mxu0 %v1878
    %2743 = vmatmul.mubr.bf16.gmra.mrb[0].mxu0 %v1877
    %v2744 = vpop.f32.mrb[0].mxu0
    %v2745 = vadd.f32 %v2704, %v2744
    %v2746 = vpop.f32.mrb[0].mxu0
    %v2747 = vadd.f32 %v2706, %v2746
    %v2748 = vpop.f32.mrb[0].mxu0
    %v2749 = vpop.f32.mrb[0].mxu0
    %2750 = vdwg.mxu0
    %2751 = vmatprep.subr.bf16.mxu0 %v2416
    %2752 = vmatpush1.bf16.msra.mxu0 %v2415
    %2753 = vmatprep.subr.bf16.mxu0 %v2420
    %2754 = vmatpush1.bf16.msra.mxu0 %v2419
    %2755 = vmatprep.subr.bf16.mxu0 %v2424
    %2756 = vmatpush1.bf16.msra.mxu0 %v2423
    %2757 = vmatprep.subr.bf16.mxu0 %v2428
    %2758 = vmatpush1.bf16.msra.mxu0 %v2427
    %2759 = vmatprep.subr.bf16.mxu0 %v2432
    %2760 = vmatpush1.bf16.msra.mxu0 %v2431
    %2761 = vmatprep.subr.bf16.mxu0 %v2436
    %2762 = vmatpush1.bf16.msra.mxu0 %v2435
    %2763 = vmatprep.subr.bf16.mxu0 %v2440
    %2764 = vmatpush1.bf16.msra.mxu0 %v2439
    %2765 = vmatprep.subr.bf16.mxu0 %v2444
    %2766 = vmatpush1.bf16.msra.mxu0 %v2443
    %2767 = vmatprep.subr.bf16.mxu0 %v2448
    %2768 = vmatpush1.bf16.msra.mxu0 %v2447
    %2769 = vmatprep.subr.bf16.mxu0 %v2452
    %2770 = vmatpush1.bf16.msra.mxu0 %v2451
    %2771 = vmatprep.subr.bf16.mxu0 %v2456
    %2772 = vmatpush1.bf16.msra.mxu0 %v2455
    %2773 = vmatprep.subr.bf16.mxu0 %v2460
    %2774 = vmatpush1.bf16.msra.mxu0 %v2459
    %2775 = vmatprep.subr.bf16.mxu0 %v2464
    %2776 = vmatpush1.bf16.msra.mxu0 %v2463
    %2777 = vmatprep.subr.bf16.mxu0 %v2468
    %2778 = vmatpush1.bf16.msra.mxu0 %v2467
    %2779 = vmatprep.subr.bf16.mxu0 %v2472
    %2780 = vmatpush1.bf16.msra.mxu0 %v2471
    %2781 = vmatprep.subr.bf16.mxu0 %v2476
    %2782 = vmatpush1.bf16.msra.mxu0 %v2475
    %2783 = vmatprep.mubr.bf16.mxu0 %v1876
    %2784 = vmatmul.mubr.bf16.gmra.mrb[0].mxu0 %v1875
    %v2785 = vpop.f32.mrb[0].mxu0
    %v2786 = vadd.f32 %v2020, %v2785
    %v2787 = vpop.f32.mrb[0].mxu0
    %v2788 = vadd.f32 %v2024, %v2787
    %v2789 = vpop.f32.mrb[0].mxu0
    %v2790 = vpop.f32.mrb[0].mxu0
    %2791 = vdwg.mxu0
    %2792 = vmatprep.subr.bf16.mxu0 %v2480
    %2793 = vmatpush1.bf16.msra.mxu0 %v2479
    %2794 = vmatprep.subr.bf16.mxu0 %v2484
    %2795 = vmatpush1.bf16.msra.mxu0 %v2483
    %2796 = vmatprep.subr.bf16.mxu0 %v2488
    %2797 = vmatpush1.bf16.msra.mxu0 %v2487
    %2798 = vmatprep.subr.bf16.mxu0 %v2492
    %2799 = vmatpush1.bf16.msra.mxu0 %v2491
    %2800 = vmatprep.subr.bf16.mxu0 %v2496
    %2801 = vmatpush1.bf16.msra.mxu0 %v2495
    %2802 = vmatprep.subr.bf16.mxu0 %v2500
    %2803 = vmatpush1.bf16.msra.mxu0 %v2499
    %2804 = vmatprep.subr.bf16.mxu0 %v2504
    %2805 = vmatpush1.bf16.msra.mxu0 %v2503
    %2806 = vmatprep.subr.bf16.mxu0 %v2508
    %2807 = vmatpush1.bf16.msra.mxu0 %v2507
    %2808 = vmatprep.subr.bf16.mxu0 %v2512
    %2809 = vmatpush1.bf16.msra.mxu0 %v2511
    %2810 = vmatprep.subr.bf16.mxu0 %v2516
    %2811 = vmatpush1.bf16.msra.mxu0 %v2515
    %2812 = vmatprep.subr.bf16.mxu0 %v2520
    %2813 = vmatpush1.bf16.msra.mxu0 %v2519
    %2814 = vmatprep.subr.bf16.mxu0 %v2524
    %2815 = vmatpush1.bf16.msra.mxu0 %v2523
    %2816 = vmatprep.subr.bf16.mxu0 %v2528
    %2817 = vmatpush1.bf16.msra.mxu0 %v2527
    %2818 = vmatprep.subr.bf16.mxu0 %v2532
    %2819 = vmatpush1.bf16.msra.mxu0 %v2531
    %2820 = vmatprep.subr.bf16.mxu0 %v2536
    %2821 = vmatpush1.bf16.msra.mxu0 %v2535
    %2822 = vmatprep.subr.bf16.mxu0 %v2540
    %2823 = vmatpush1.bf16.msra.mxu0 %v2539
    %2824 = vmatprep.mubr.bf16.mxu0 %v1878
    %2825 = vmatmul.mubr.bf16.gmra.mrb[0].mxu0 %v1877
    %v2826 = vpop.f32.mrb[0].mxu0
    %v2827 = vadd.f32 %v2786, %v2826
    %v2828 = vpop.f32.mrb[0].mxu0
    %v2829 = vadd.f32 %v2788, %v2828
    %v2830 = vpop.f32.mrb[0].mxu0
    %v2831 = vpop.f32.mrb[0].mxu0
    %2832 = vdwg.mxu0
    %v2833 = vpack.c.bf16 %v2745, %v2745
    %v2834 = vpack.c.bf16 %v2747, %v2747
    %v2835 = vpack.c.bf16 %v2827, %v2827
    %v2836 = vpack.c.bf16 %v2829, %v2829
    %v2837 = vld [vmem:[%s4] sm:$0xff]
    %v2838 = vld [vmem:[%s4 + $0x8] sm:$0xff]
    %v2839 = vld [vmem:[%s4 + $0x10] sm:$0xff]
    %v2840 = vld [vmem:[%s4 + $0x18] sm:$0xff]
    %v2841 = vld [vmem:[%s4 + $0x20] sm:$0xff]
    %v2842 = vld [vmem:[%s4 + $0x28] sm:$0xff]
    %v2843 = vld [vmem:[%s4 + $0x30] sm:$0xff]
    %v2844 = vld [vmem:[%s4 + $0x38] sm:$0xff]
    %v2845 = vld [vmem:[%s4 + $0x40] sm:$0xff]
    %v2846 = vld [vmem:[%s4 + $0x48] sm:$0xff]
    %v2847 = vld [vmem:[%s4 + $0x50] sm:$0xff]
    %v2848 = vld [vmem:[%s4 + $0x58] sm:$0xff]
    %v2849 = vld [vmem:[%s4 + $0x60] sm:$0xff]
    %v2850 = vld [vmem:[%s4 + $0x68] sm:$0xff]
    %v2851 = vld [vmem:[%s4 + $0x70] sm:$0xff]
    %v2852 = vld [vmem:[%s4 + $0x78] sm:$0xff]
    %v2853 = vld [vmem:[%s4 + $0x80] sm:$0xff]
    %v2854 = vld [vmem:[%s4 + $0x88] sm:$0xff]
    %v2855 = vld [vmem:[%s4 + $0x90] sm:$0xff]
    %v2856 = vld [vmem:[%s4 + $0x98] sm:$0xff]
    %v2857 = vld [vmem:[%s4 + $0xa0] sm:$0xff]
    %v2858 = vld [vmem:[%s4 + $0xa8] sm:$0xff]
    %v2859 = vld [vmem:[%s4 + $0xb0] sm:$0xff]
    %v2860 = vld [vmem:[%s4 + $0xb8] sm:$0xff]
    %v2861 = vld [vmem:[%s4 + $0xc0] sm:$0xff]
    %v2862 = vld [vmem:[%s4 + $0xc8] sm:$0xff]
    %v2863 = vld [vmem:[%s4 + $0xd0] sm:$0xff]
    %v2864 = vld [vmem:[%s4 + $0xd8] sm:$0xff]
    %v2865 = vld [vmem:[%s4 + $0xe0] sm:$0xff]
    %v2866 = vld [vmem:[%s4 + $0xe8] sm:$0xff]
    %v2867 = vld [vmem:[%s4 + $0xf0] sm:$0xff]
    %v2868 = vld [vmem:[%s4 + $0xf8] sm:$0xff]
    %v2869 = vld [vmem:[%s4 + $0x100] sm:$0xff]
    %v2870 = vld [vmem:[%s4 + $0x108] sm:$0xff]
    %v2871 = vld [vmem:[%s4 + $0x110] sm:$0xff]
    %v2872 = vld [vmem:[%s4 + $0x118] sm:$0xff]
    %v2873 = vld [vmem:[%s4 + $0x120] sm:$0xff]
    %v2874 = vld [vmem:[%s4 + $0x128] sm:$0xff]
    %v2875 = vld [vmem:[%s4 + $0x130] sm:$0xff]
    %v2876 = vld [vmem:[%s4 + $0x138] sm:$0xff]
    %v2877 = vld [vmem:[%s4 + $0x140] sm:$0xff]
    %v2878 = vld [vmem:[%s4 + $0x148] sm:$0xff]
    %v2879 = vld [vmem:[%s4 + $0x150] sm:$0xff]
    %v2880 = vld [vmem:[%s4 + $0x158] sm:$0xff]
    %v2881 = vld [vmem:[%s4 + $0x160] sm:$0xff]
    %v2882 = vld [vmem:[%s4 + $0x168] sm:$0xff]
    %v2883 = vld [vmem:[%s4 + $0x170] sm:$0xff]
    %v2884 = vld [vmem:[%s4 + $0x178] sm:$0xff]
    %v2885 = vld [vmem:[%s4 + $0x180] sm:$0xff]
    %v2886 = vld [vmem:[%s4 + $0x188] sm:$0xff]
    %v2887 = vld [vmem:[%s4 + $0x190] sm:$0xff]
    %v2888 = vld [vmem:[%s4 + $0x198] sm:$0xff]
    %v2889 = vld [vmem:[%s4 + $0x1a0] sm:$0xff]
    %v2890 = vld [vmem:[%s4 + $0x1a8] sm:$0xff]
    %v2891 = vld [vmem:[%s4 + $0x1b0] sm:$0xff]
    %v2892 = vld [vmem:[%s4 + $0x1b8] sm:$0xff]
    %v2893 = vld [vmem:[%s4 + $0x1c0] sm:$0xff]
    %v2894 = vld [vmem:[%s4 + $0x1c8] sm:$0xff]
    %v2895 = vld [vmem:[%s4 + $0x1d0] sm:$0xff]
    %v2896 = vld [vmem:[%s4 + $0x1d8] sm:$0xff]
    %v2897 = vld [vmem:[%s4 + $0x1e0] sm:$0xff]
    %v2898 = vld [vmem:[%s4 + $0x1e8] sm:$0xff]
    %v2899 = vld [vmem:[%s4 + $0x1f0] sm:$0xff]
    %v2900 = vld [vmem:[%s4 + $0x1f8] sm:$0xff]
    %v2901 = vld [vmem:[%s5] sm:$0x3]
    %v2903 = vlaneseq
    %v2904 = vshrl.u32 %v2903, 7
    %v2905 = vsub.s32 0, %v2904
    %v2906 = vrot.slane %v2901, %v2905
    %v2907 = vlaneseq
    %v2908 = vshrl.u32 %v2907, 7
    %v2909 = vsub.s32 1, %v2908
    %v2910 = vrot.slane %v2901, %v2909
    %v2977 = vunpack.c.l.b16 %v2837
    %v2978 = vunpack.c.h.b16 %v2837
    %v2979 = vunpack.c.l.b16 %v2838
    %v2980 = vunpack.c.h.b16 %v2838
    %v2981 = vunpack.c.l.b16 %v2839
    %v2982 = vunpack.c.h.b16 %v2839
    %v2983 = vunpack.c.l.b16 %v2840
    %v2984 = vunpack.c.h.b16 %v2840
    %v2985 = vunpack.c.l.b16 %v2841
    %v2986 = vunpack.c.h.b16 %v2841
    %v2987 = vunpack.c.l.b16 %v2842
    %v2988 = vunpack.c.h.b16 %v2842
    %v2989 = vunpack.c.l.b16 %v2843
    %v2990 = vunpack.c.h.b16 %v2843
    %v2991 = vunpack.c.l.b16 %v2844
    %v2992 = vunpack.c.h.b16 %v2844
    %v2993 = vunpack.c.l.b16 %v2845
    %v2994 = vunpack.c.h.b16 %v2845
    %v2995 = vunpack.c.l.b16 %v2846
    %v2996 = vunpack.c.h.b16 %v2846
    %v2997 = vunpack.c.l.b16 %v2847
    %v2998 = vunpack.c.h.b16 %v2847
    %v2999 = vunpack.c.l.b16 %v2848
    %v3000 = vunpack.c.h.b16 %v2848
    %v3001 = vunpack.c.l.b16 %v2849
    %v3002 = vunpack.c.h.b16 %v2849
    %v3003 = vunpack.c.l.b16 %v2850
    %v3004 = vunpack.c.h.b16 %v2850
    %v3005 = vunpack.c.l.b16 %v2851
    %v3006 = vunpack.c.h.b16 %v2851
    %v3007 = vunpack.c.l.b16 %v2852
    %v3008 = vunpack.c.h.b16 %v2852
    %v3009 = vunpack.c.l.b16 %v2853
    %v3010 = vunpack.c.h.b16 %v2853
    %v3011 = vunpack.c.l.b16 %v2854
    %v3012 = vunpack.c.h.b16 %v2854
    %v3013 = vunpack.c.l.b16 %v2855
    %v3014 = vunpack.c.h.b16 %v2855
    %v3015 = vunpack.c.l.b16 %v2856
    %v3016 = vunpack.c.h.b16 %v2856
    %v3017 = vunpack.c.l.b16 %v2857
    %v3018 = vunpack.c.h.b16 %v2857
    %v3019 = vunpack.c.l.b16 %v2858
    %v3020 = vunpack.c.h.b16 %v2858
    %v3021 = vunpack.c.l.b16 %v2859
    %v3022 = vunpack.c.h.b16 %v2859
    %v3023 = vunpack.c.l.b16 %v2860
    %v3024 = vunpack.c.h.b16 %v2860
    %v3025 = vunpack.c.l.b16 %v2861
    %v3026 = vunpack.c.h.b16 %v2861
    %v3027 = vunpack.c.l.b16 %v2862
    %v3028 = vunpack.c.h.b16 %v2862
    %v3029 = vunpack.c.l.b16 %v2863
    %v3030 = vunpack.c.h.b16 %v2863
    %v3031 = vunpack.c.l.b16 %v2864
    %v3032 = vunpack.c.h.b16 %v2864
    %v3033 = vunpack.c.l.b16 %v2865
    %v3034 = vunpack.c.h.b16 %v2865
    %v3035 = vunpack.c.l.b16 %v2866
    %v3036 = vunpack.c.h.b16 %v2866
    %v3037 = vunpack.c.l.b16 %v2867
    %v3038 = vunpack.c.h.b16 %v2867
    %v3039 = vunpack.c.l.b16 %v2868
    %v3040 = vunpack.c.h.b16 %v2868
    %v3041 = vunpack.c.l.b16 %v2869
    %v3042 = vunpack.c.h.b16 %v2869
    %v3043 = vunpack.c.l.b16 %v2870
    %v3044 = vunpack.c.h.b16 %v2870
    %v3045 = vunpack.c.l.b16 %v2871
    %v3046 = vunpack.c.h.b16 %v2871
    %v3047 = vunpack.c.l.b16 %v2872
    %v3048 = vunpack.c.h.b16 %v2872
    %v3049 = vunpack.c.l.b16 %v2873
    %v3050 = vunpack.c.h.b16 %v2873
    %v3051 = vunpack.c.l.b16 %v2874
    %v3052 = vunpack.c.h.b16 %v2874
    %v3053 = vunpack.c.l.b16 %v2875
    %v3054 = vunpack.c.h.b16 %v2875
    %v3055 = vunpack.c.l.b16 %v2876
    %v3056 = vunpack.c.h.b16 %v2876
    %v3057 = vunpack.c.l.b16 %v2877
    %v3058 = vunpack.c.h.b16 %v2877
    %v3059 = vunpack.c.l.b16 %v2878
    %v3060 = vunpack.c.h.b16 %v2878
    %v3061 = vunpack.c.l.b16 %v2879
    %v3062 = vunpack.c.h.b16 %v2879
    %v3063 = vunpack.c.l.b16 %v2880
    %v3064 = vunpack.c.h.b16 %v2880
    %v3065 = vunpack.c.l.b16 %v2881
    %v3066 = vunpack.c.h.b16 %v2881
    %v3067 = vunpack.c.l.b16 %v2882
    %v3068 = vunpack.c.h.b16 %v2882
    %v3069 = vunpack.c.l.b16 %v2883
    %v3070 = vunpack.c.h.b16 %v2883
    %v3071 = vunpack.c.l.b16 %v2884
    %v3072 = vunpack.c.h.b16 %v2884
    %v3073 = vunpack.c.l.b16 %v2885
    %v3074 = vunpack.c.h.b16 %v2885
    %v3075 = vunpack.c.l.b16 %v2886
    %v3076 = vunpack.c.h.b16 %v2886
    %v3077 = vunpack.c.l.b16 %v2887
    %v3078 = vunpack.c.h.b16 %v2887
    %v3079 = vunpack.c.l.b16 %v2888
    %v3080 = vunpack.c.h.b16 %v2888
    %v3081 = vunpack.c.l.b16 %v2889
    %v3082 = vunpack.c.h.b16 %v2889
    %v3083 = vunpack.c.l.b16 %v2890
    %v3084 = vunpack.c.h.b16 %v2890
    %v3085 = vunpack.c.l.b16 %v2891
    %v3086 = vunpack.c.h.b16 %v2891
    %v3087 = vunpack.c.l.b16 %v2892
    %v3088 = vunpack.c.h.b16 %v2892
    %v3089 = vunpack.c.l.b16 %v2893
    %v3090 = vunpack.c.h.b16 %v2893
    %v3091 = vunpack.c.l.b16 %v2894
    %v3092 = vunpack.c.h.b16 %v2894
    %v3093 = vunpack.c.l.b16 %v2895
    %v3094 = vunpack.c.h.b16 %v2895
    %v3095 = vunpack.c.l.b16 %v2896
    %v3096 = vunpack.c.h.b16 %v2896
    %v3097 = vunpack.c.l.b16 %v2897
    %v3098 = vunpack.c.h.b16 %v2897
    %v3099 = vunpack.c.l.b16 %v2898
    %v3100 = vunpack.c.h.b16 %v2898
    %v3101 = vunpack.c.l.b16 %v2899
    %v3102 = vunpack.c.h.b16 %v2899
    %v3103 = vunpack.c.l.b16 %v2900
    %v3104 = vunpack.c.h.b16 %v2900
    %v3105 = vpack.c.b16 %v2979, %v2977
    %v3106 = vpack.c.b16 %v2980, %v2978
    %v3107 = vpack.c.b16 %v2983, %v2981
    %v3108 = vpack.c.b16 %v2984, %v2982
    %v3109 = vpack.c.b16 %v2987, %v2985
    %v3110 = vpack.c.b16 %v2988, %v2986
    %v3111 = vpack.c.b16 %v2991, %v2989
    %v3112 = vpack.c.b16 %v2992, %v2990
    %v3113 = vpack.c.b16 %v2995, %v2993
    %v3114 = vpack.c.b16 %v2996, %v2994
    %v3115 = vpack.c.b16 %v2999, %v2997
    %v3116 = vpack.c.b16 %v3000, %v2998
    %v3117 = vpack.c.b16 %v3003, %v3001
    %v3118 = vpack.c.b16 %v3004, %v3002
    %v3119 = vpack.c.b16 %v3007, %v3005
    %v3120 = vpack.c.b16 %v3008, %v3006
    %v3121 = vpack.c.b16 %v3011, %v3009
    %v3122 = vpack.c.b16 %v3012, %v3010
    %v3123 = vpack.c.b16 %v3015, %v3013
    %v3124 = vpack.c.b16 %v3016, %v3014
    %v3125 = vpack.c.b16 %v3019, %v3017
    %v3126 = vpack.c.b16 %v3020, %v3018
    %v3127 = vpack.c.b16 %v3023, %v3021
    %v3128 = vpack.c.b16 %v3024, %v3022
    %v3129 = vpack.c.b16 %v3027, %v3025
    %v3130 = vpack.c.b16 %v3028, %v3026
    %v3131 = vpack.c.b16 %v3031, %v3029
    %v3132 = vpack.c.b16 %v3032, %v3030
    %v3133 = vpack.c.b16 %v3035, %v3033
    %v3134 = vpack.c.b16 %v3036, %v3034
    %v3135 = vpack.c.b16 %v3039, %v3037
    %v3136 = vpack.c.b16 %v3040, %v3038
    %v3137 = vpack.c.b16 %v3043, %v3041
    %v3138 = vpack.c.b16 %v3044, %v3042
    %v3139 = vpack.c.b16 %v3047, %v3045
    %v3140 = vpack.c.b16 %v3048, %v3046
    %v3141 = vpack.c.b16 %v3051, %v3049
    %v3142 = vpack.c.b16 %v3052, %v3050
    %v3143 = vpack.c.b16 %v3055, %v3053
    %v3144 = vpack.c.b16 %v3056, %v3054
    %v3145 = vpack.c.b16 %v3059, %v3057
    %v3146 = vpack.c.b16 %v3060, %v3058
    %v3147 = vpack.c.b16 %v3063, %v3061
    %v3148 = vpack.c.b16 %v3064, %v3062
    %v3149 = vpack.c.b16 %v3067, %v3065
    %v3150 = vpack.c.b16 %v3068, %v3066
    %v3151 = vpack.c.b16 %v3071, %v3069
    %v3152 = vpack.c.b16 %v3072, %v3070
    %v3153 = vpack.c.b16 %v3075, %v3073
    %v3154 = vpack.c.b16 %v3076, %v3074
    %v3155 = vpack.c.b16 %v3079, %v3077
    %v3156 = vpack.c.b16 %v3080, %v3078
    %v3157 = vpack.c.b16 %v3083, %v3081
    %v3158 = vpack.c.b16 %v3084, %v3082
    %v3159 = vpack.c.b16 %v3087, %v3085
    %v3160 = vpack.c.b16 %v3088, %v3086
    %v3161 = vpack.c.b16 %v3091, %v3089
    %v3162 = vpack.c.b16 %v3092, %v3090
    %v3163 = vpack.c.b16 %v3095, %v3093
    %v3164 = vpack.c.b16 %v3096, %v3094
    %v3165 = vpack.c.b16 %v3099, %v3097
    %v3166 = vpack.c.b16 %v3100, %v3098
    %v3167 = vpack.c.b16 %v3103, %v3101
    %v3168 = vpack.c.b16 %v3104, %v3102
    %3233 = vmatprep.subr.bf16.mxu0 %v3106
    %3234 = vmatpush1.bf16.msra.mxu0 %v3105
    %3235 = vmatprep.subr.bf16.mxu0 %v3108
    %3236 = vmatpush1.bf16.msra.mxu0 %v3107
    %3237 = vmatprep.subr.bf16.mxu0 %v3110
    %3238 = vmatpush1.bf16.msra.mxu0 %v3109
    %3239 = vmatprep.subr.bf16.mxu0 %v3112
    %3240 = vmatpush1.bf16.msra.mxu0 %v3111
    %3241 = vmatprep.subr.bf16.mxu0 %v3114
    %3242 = vmatpush1.bf16.msra.mxu0 %v3113
    %3243 = vmatprep.subr.bf16.mxu0 %v3116
    %3244 = vmatpush1.bf16.msra.mxu0 %v3115
    %3245 = vmatprep.subr.bf16.mxu0 %v3118
    %3246 = vmatpush1.bf16.msra.mxu0 %v3117
    %3247 = vmatprep.subr.bf16.mxu0 %v3120
    %3248 = vmatpush1.bf16.msra.mxu0 %v3119
    %3249 = vmatprep.subr.bf16.mxu0 %v3122
    %3250 = vmatpush1.bf16.msra.mxu0 %v3121
    %3251 = vmatprep.subr.bf16.mxu0 %v3124
    %3252 = vmatpush1.bf16.msra.mxu0 %v3123
    %3253 = vmatprep.subr.bf16.mxu0 %v3126
    %3254 = vmatpush1.bf16.msra.mxu0 %v3125
    %3255 = vmatprep.subr.bf16.mxu0 %v3128
    %3256 = vmatpush1.bf16.msra.mxu0 %v3127
    %3257 = vmatprep.subr.bf16.mxu0 %v3130
    %3258 = vmatpush1.bf16.msra.mxu0 %v3129
    %3259 = vmatprep.subr.bf16.mxu0 %v3132
    %3260 = vmatpush1.bf16.msra.mxu0 %v3131
    %3261 = vmatprep.subr.bf16.mxu0 %v3134
    %3262 = vmatpush1.bf16.msra.mxu0 %v3133
    %3263 = vmatprep.subr.bf16.mxu0 %v3136
    %3264 = vmatpush1.bf16.msra.mxu0 %v3135
    %3265 = vmatprep.mubr.bf16.mxu0 %v2834
    %3266 = vmatmul.mubr.bf16.gmra.mrb[0].mxu0 %v2833
    %v3267 = vpop.f32.mrb[0].mxu0
    %v3268 = vadd.f32 %v2906, %v3267
    %v3269 = vpop.f32.mrb[0].mxu0
    %v3270 = vadd.f32 %v2910, %v3269
    %v3271 = vpop.f32.mrb[0].mxu0
    %v3272 = vpop.f32.mrb[0].mxu0
    %3273 = vdwg.mxu0
    %3274 = vmatprep.subr.bf16.mxu0 %v3138
    %3275 = vmatpush1.bf16.msra.mxu0 %v3137
    %3276 = vmatprep.subr.bf16.mxu0 %v3140
    %3277 = vmatpush1.bf16.msra.mxu0 %v3139
    %3278 = vmatprep.subr.bf16.mxu0 %v3142
    %3279 = vmatpush1.bf16.msra.mxu0 %v3141
    %3280 = vmatprep.subr.bf16.mxu0 %v3144
    %3281 = vmatpush1.bf16.msra.mxu0 %v3143
    %3282 = vmatprep.subr.bf16.mxu0 %v3146
    %3283 = vmatpush1.bf16.msra.mxu0 %v3145
    %3284 = vmatprep.subr.bf16.mxu0 %v3148
    %3285 = vmatpush1.bf16.msra.mxu0 %v3147
    %3286 = vmatprep.subr.bf16.mxu0 %v3150
    %3287 = vmatpush1.bf16.msra.mxu0 %v3149
    %3288 = vmatprep.subr.bf16.mxu0 %v3152
    %3289 = vmatpush1.bf16.msra.mxu0 %v3151
    %3290 = vmatprep.subr.bf16.mxu0 %v3154
    %3291 = vmatpush1.bf16.msra.mxu0 %v3153
    %3292 = vmatprep.subr.bf16.mxu0 %v3156
    %3293 = vmatpush1.bf16.msra.mxu0 %v3155
    %3294 = vmatprep.subr.bf16.mxu0 %v3158
    %3295 = vmatpush1.bf16.msra.mxu0 %v3157
    %3296 = vmatprep.subr.bf16.mxu0 %v3160
    %3297 = vmatpush1.bf16.msra.mxu0 %v3159
    %3298 = vmatprep.subr.bf16.mxu0 %v3162
    %3299 = vmatpush1.bf16.msra.mxu0 %v3161
    %3300 = vmatprep.subr.bf16.mxu0 %v3164
    %3301 = vmatpush1.bf16.msra.mxu0 %v3163
    %3302 = vmatprep.subr.bf16.mxu0 %v3166
    %3303 = vmatpush1.bf16.msra.mxu0 %v3165
    %3304 = vmatprep.subr.bf16.mxu0 %v3168
    %3305 = vmatpush1.bf16.msra.mxu0 %v3167
    %3306 = vmatprep.mubr.bf16.mxu0 %v2836
    %3307 = vmatmul.mubr.bf16.gmra.mrb[0].mxu0 %v2835
    %v3308 = vpop.f32.mrb[0].mxu0
    %v3309 = vadd.f32 %v3268, %v3308
    %v3310 = vpop.f32.mrb[0].mxu0
    %v3311 = vadd.f32 %v3270, %v3310
    %v3312 = vpop.f32.mrb[0].mxu0
    %v3313 = vpop.f32.mrb[0].mxu0
    %3314 = vdwg.mxu0
    %v3315 = vmax.f32 %v3309, 0.0
    %v3316 = vmax.f32 %v3311, 0.0
    %v3317 = vld [vmem:[%s6] sm:$0xff]
    %v3318 = vld [vmem:[%s6 + $0x8] sm:$0xff]
    %v3319 = vld [vmem:[%s6 + $0x10] sm:$0xff]
    %v3320 = vld [vmem:[%s6 + $0x18] sm:$0xff]
    %v3321 = vld [vmem:[%s6 + $0x20] sm:$0xff]
    %v3322 = vld [vmem:[%s6 + $0x28] sm:$0xff]
    %v3323 = vld [vmem:[%s6 + $0x30] sm:$0xff]
    %v3324 = vld [vmem:[%s6 + $0x38] sm:$0xff]
    %v3325 = vld [vmem:[%s6 + $0x40] sm:$0xff]
    %v3326 = vld [vmem:[%s6 + $0x48] sm:$0xff]
    %v3327 = vld [vmem:[%s6 + $0x50] sm:$0xff]
    %v3328 = vld [vmem:[%s6 + $0x58] sm:$0xff]
    %v3329 = vld [vmem:[%s6 + $0x60] sm:$0xff]
    %v3330 = vld [vmem:[%s6 + $0x68] sm:$0xff]
    %v3331 = vld [vmem:[%s6 + $0x70] sm:$0xff]
    %v3332 = vld [vmem:[%s6 + $0x78] sm:$0xff]
    %v3333 = vld [vmem:[%s6 + $0x80] sm:$0xff]
    %v3334 = vld [vmem:[%s6 + $0x88] sm:$0xff]
    %v3335 = vld [vmem:[%s6 + $0x90] sm:$0xff]
    %v3336 = vld [vmem:[%s6 + $0x98] sm:$0xff]
    %v3337 = vld [vmem:[%s6 + $0xa0] sm:$0xff]
    %v3338 = vld [vmem:[%s6 + $0xa8] sm:$0xff]
    %v3339 = vld [vmem:[%s6 + $0xb0] sm:$0xff]
    %v3340 = vld [vmem:[%s6 + $0xb8] sm:$0xff]
    %v3341 = vld [vmem:[%s6 + $0xc0] sm:$0xff]
    %v3342 = vld [vmem:[%s6 + $0xc8] sm:$0xff]
    %v3343 = vld [vmem:[%s6 + $0xd0] sm:$0xff]
    %v3344 = vld [vmem:[%s6 + $0xd8] sm:$0xff]
    %v3345 = vld [vmem:[%s6 + $0xe0] sm:$0xff]
    %v3346 = vld [vmem:[%s6 + $0xe8] sm:$0xff]
    %v3347 = vld [vmem:[%s6 + $0xf0] sm:$0xff]
    %v3348 = vld [vmem:[%s6 + $0xf8] sm:$0xff]
    %v3349 = vld [vmem:[%s7] sm:$0x1]
    %v3351 = vlaneseq
    %v3352 = vshrl.u32 %v3351, 7
    %v3353 = vsub.s32 0, %v3352
    %v3354 = vrot.slane %v3349, %v3353
    %3356 = vmatprep.subr.mxu0 0.0
    %3357 = vmatpush1.msra.mxu0 %v3317
    %3358 = vmatprep.subr.mxu0 0.0
    %3359 = vmatpush1.msra.mxu0 %v3318
    %3360 = vmatprep.subr.mxu0 0.0
    %3361 = vmatpush1.msra.mxu0 %v3319
    %3362 = vmatprep.subr.mxu0 0.0
    %3363 = vmatpush1.msra.mxu0 %v3320
    %3364 = vmatprep.subr.mxu0 0.0
    %3365 = vmatpush1.msra.mxu0 %v3321
    %3366 = vmatprep.subr.mxu0 0.0
    %3367 = vmatpush1.msra.mxu0 %v3322
    %3368 = vmatprep.subr.mxu0 0.0
    %3369 = vmatpush1.msra.mxu0 %v3323
    %3370 = vmatprep.subr.mxu0 0.0
    %3371 = vmatpush1.msra.mxu0 %v3324
    %3372 = vmatprep.subr.mxu0 0.0
    %3373 = vmatpush1.msra.mxu0 %v3325
    %3374 = vmatprep.subr.mxu0 0.0
    %3375 = vmatpush1.msra.mxu0 %v3326
    %3376 = vmatprep.subr.mxu0 0.0
    %3377 = vmatpush1.msra.mxu0 %v3327
    %3378 = vmatprep.subr.mxu0 0.0
    %3379 = vmatpush1.msra.mxu0 %v3328
    %3380 = vmatprep.subr.mxu0 0.0
    %3381 = vmatpush1.msra.mxu0 %v3329
    %3382 = vmatprep.subr.mxu0 0.0
    %3383 = vmatpush1.msra.mxu0 %v3330
    %3384 = vmatprep.subr.mxu0 0.0
    %3385 = vmatpush1.msra.mxu0 %v3331
    %3386 = vmatprep.subr.mxu0 0.0
    %3387 = vmatpush1.msra.mxu0 %v3332
    %3388 = vmatprep.subr.mxu0 0.0
    %3389 = vmatpush1.msra.mxu0 %v3333
    %3390 = vmatprep.subr.mxu0 0.0
    %3391 = vmatpush1.msra.mxu0 %v3334
    %3392 = vmatprep.subr.mxu0 0.0
    %3393 = vmatpush1.msra.mxu0 %v3335
    %3394 = vmatprep.subr.mxu0 0.0
    %3395 = vmatpush1.msra.mxu0 %v3336
    %3396 = vmatprep.subr.mxu0 0.0
    %3397 = vmatpush1.msra.mxu0 %v3337
    %3398 = vmatprep.subr.mxu0 0.0
    %3399 = vmatpush1.msra.mxu0 %v3338
    %3400 = vmatprep.subr.mxu0 0.0
    %3401 = vmatpush1.msra.mxu0 %v3339
    %3402 = vmatprep.subr.mxu0 0.0
    %3403 = vmatpush1.msra.mxu0 %v3340
    %3404 = vmatprep.subr.mxu0 0.0
    %3405 = vmatpush1.msra.mxu0 %v3341
    %3406 = vmatprep.subr.mxu0 0.0
    %3407 = vmatpush1.msra.mxu0 %v3342
    %3408 = vmatprep.subr.mxu0 0.0
    %3409 = vmatpush1.msra.mxu0 %v3343
    %3410 = vmatprep.subr.mxu0 0.0
    %3411 = vmatpush1.msra.mxu0 %v3344
    %3412 = vmatprep.subr.mxu0 0.0
    %3413 = vmatpush1.msra.mxu0 %v3345
    %3414 = vmatprep.subr.mxu0 0.0
    %3415 = vmatpush1.msra.mxu0 %v3346
    %3416 = vmatprep.subr.mxu0 0.0
    %3417 = vmatpush1.msra.mxu0 %v3347
    %3418 = vmatprep.subr.mxu0 0.0
    %3419 = vmatpush1.msra.mxu0 %v3348
    %3420 = vmatprep.mubr.f32.mxu0 %v3316
    %3421 = vmatmul.mubr.f32.gmra.mrb[0].mxu0 %v3315
    %v3422 = vpop.f32.mrb[0].mxu0
    %v3423 = vadd.f32 %v3354, %v3422
    %v3424 = vpop.f32.mrb[0].mxu0
    %3425 = vdwg.mxu0
    %v3426 = vtanh.pop %v3423
    %v3427 = vld [vmem:[%s8] sm:$0x1]
    %v3429 = vlaneseq
    %v3430 = vshrl.u32 %v3429, 7
    %v3431 = vsub.s32 0, %v3430
    %v3432 = vrot.slane %v3427, %v3431
    %v3434 = vmul.f32 %v3426, %v3432
    %vm3435 = vcmask 1041408
    %v3436 = vsel %vm3435, %v3434, 0.0
    %3437 = vadd.xlane.f32.xlu0 %v3436
    %v3438 = vpop.xlane.xlu0 %3437
    %v3439 = vld [vmem:[#allocation2] sm:$0x1]
    %v3441 = vlaneseq
    %v3442 = vshrl.u32 %v3441, 7
    %v3443 = vsub.s32 0, %v3442
    %v3444 = vrot.slane %v3439, %v3443
    %v3446 = vadd.f32 %v3438, %v3444
    %vm3447 = vcmask 1024
    %v3448 = vsel %vm3447, %v3446, -inf
    %v3449 = vrot.slane %v3448, 4
    %v3450 = vmax.f32 %v3448, %v3449
    %v3451 = vrot.slane %v3450, 2
    %v3452 = vmax.f32 %v3450, %v3451
    %v3453 = vrot.slane %v3452, 1
    %v3454 = vmax.f32 %v3452, %v3453
    %v3455 = vsub.f32 %v3446, %v3454
    %v3456 = vmul.f32 %v3455, 1.442695
    %v3457 = vpow.pop %v3456
    %v3458 = vsel %vm3447, %v3457, 0.0
    %v3459 = vrot.slane %v3458, 4
    %v3460 = vadd.f32 %v3458, %v3459
    %v3461 = vrot.slane %v3460, 2
    %v3462 = vadd.f32 %v3460, %v3461
    %v3463 = vrot.slane %v3462, 1
    %v3464 = vadd.f32 %v3462, %v3463
    %v3465 = vrcp.pop %v3464
    %v3466 = vmul.f32 %v3457, %v3465
    %3468 = vset.pattern.permute.xlu0 0
    %3469 = vperm.xlu0 %3468, %v3466
    %v3470 = vpop.permute.xlu0 %3469
    %v3472 = vmul.f32 %v3470, %v3315
    %v3473 = vmul.f32 %v3470, %v3316
    %v3474 = vsel %vm3435, %v3472, 0.0
    %v3475 = vrot.slane %v3474, 4
    %v3476 = vadd.f32 %v3474, %v3475
    %v3477 = vrot.slane %v3476, 2
    %v3478 = vadd.f32 %v3476, %v3477
    %v3479 = vrot.slane %v3478, 1
    %v3480 = vadd.f32 %v3478, %v3479
    %v3481 = vsel %vm3435, %v3473, 0.0
    %v3482 = vrot.slane %v3481, 4
    %v3483 = vadd.f32 %v3481, %v3482
    %v3484 = vrot.slane %v3483, 2
    %v3485 = vadd.f32 %v3483, %v3484
    %v3486 = vrot.slane %v3485, 1
    %v3487 = vadd.f32 %v3485, %v3486
    %v3488 = vld [vmem:[%s10] sm:$0xff]
    %v3489 = vld [vmem:[%s10 + $0x8] sm:$0xff]
    %v3490 = vld [vmem:[%s10 + $0x10] sm:$0xff]
    %v3491 = vld [vmem:[%s10 + $0x18] sm:$0xff]
    %v3492 = vld [vmem:[%s10 + $0x20] sm:$0xff]
    %v3493 = vld [vmem:[%s10 + $0x28] sm:$0xff]
    %v3494 = vld [vmem:[%s10 + $0x30] sm:$0xff]
    %v3495 = vld [vmem:[%s10 + $0x38] sm:$0xff]
    %v3496 = vld [vmem:[%s10 + $0x40] sm:$0xff]
    %v3497 = vld [vmem:[%s10 + $0x48] sm:$0xff]
    %v3498 = vld [vmem:[%s10 + $0x50] sm:$0xff]
    %v3499 = vld [vmem:[%s10 + $0x58] sm:$0xff]
    %v3500 = vld [vmem:[%s10 + $0x60] sm:$0xff]
    %v3501 = vld [vmem:[%s10 + $0x68] sm:$0xff]
    %v3502 = vld [vmem:[%s10 + $0x70] sm:$0xff]
    %v3503 = vld [vmem:[%s10 + $0x78] sm:$0xff]
    %v3504 = vld [vmem:[%s10 + $0x80] sm:$0xff]
    %v3505 = vld [vmem:[%s10 + $0x88] sm:$0xff]
    %v3506 = vld [vmem:[%s10 + $0x90] sm:$0xff]
    %v3507 = vld [vmem:[%s10 + $0x98] sm:$0xff]
    %v3508 = vld [vmem:[%s10 + $0xa0] sm:$0xff]
    %v3509 = vld [vmem:[%s10 + $0xa8] sm:$0xff]
    %v3510 = vld [vmem:[%s10 + $0xb0] sm:$0xff]
    %v3511 = vld [vmem:[%s10 + $0xb8] sm:$0xff]
    %v3512 = vld [vmem:[%s10 + $0xc0] sm:$0xff]
    %v3513 = vld [vmem:[%s10 + $0xc8] sm:$0xff]
    %v3514 = vld [vmem:[%s10 + $0xd0] sm:$0xff]
    %v3515 = vld [vmem:[%s10 + $0xd8] sm:$0xff]
    %v3516 = vld [vmem:[%s10 + $0xe0] sm:$0xff]
    %v3517 = vld [vmem:[%s10 + $0xe8] sm:$0xff]
    %v3518 = vld [vmem:[%s10 + $0xf0] sm:$0xff]
    %v3519 = vld [vmem:[%s10 + $0xf8] sm:$0xff]
    %v3520 = vld [vmem:[%s11] sm:$0x1]
    %3521 = vmatprep.subr.mxu0 0.0
    %3522 = vmatpush1.msra.mxu0 %v3488
    %3523 = vmatprep.subr.mxu0 0.0
    %3524 = vmatpush1.msra.mxu0 %v3489
    %3525 = vmatprep.subr.mxu0 0.0
    %3526 = vmatpush1.msra.mxu0 %v3490
    %3527 = vmatprep.subr.mxu0 0.0
    %3528 = vmatpush1.msra.mxu0 %v3491
    %3529 = vmatprep.subr.mxu0 0.0
    %3530 = vmatpush1.msra.mxu0 %v3492
    %3531 = vmatprep.subr.mxu0 0.0
    %3532 = vmatpush1.msra.mxu0 %v3493
    %3533 = vmatprep.subr.mxu0 0.0
    %3534 = vmatpush1.msra.mxu0 %v3494
    %3535 = vmatprep.subr.mxu0 0.0
    %3536 = vmatpush1.msra.mxu0 %v3495
    %3537 = vmatprep.subr.mxu0 0.0
    %3538 = vmatpush1.msra.mxu0 %v3496
    %3539 = vmatprep.subr.mxu0 0.0
    %3540 = vmatpush1.msra.mxu0 %v3497
    %3541 = vmatprep.subr.mxu0 0.0
    %3542 = vmatpush1.msra.mxu0 %v3498
    %3543 = vmatprep.subr.mxu0 0.0
    %3544 = vmatpush1.msra.mxu0 %v3499
    %3545 = vmatprep.subr.mxu0 0.0
    %3546 = vmatpush1.msra.mxu0 %v3500
    %3547 = vmatprep.subr.mxu0 0.0
    %3548 = vmatpush1.msra.mxu0 %v3501
    %3549 = vmatprep.subr.mxu0 0.0
    %3550 = vmatpush1.msra.mxu0 %v3502
    %3551 = vmatprep.subr.mxu0 0.0
    %3552 = vmatpush1.msra.mxu0 %v3503
    %3553 = vmatprep.subr.mxu0 0.0
    %3554 = vmatpush1.msra.mxu0 %v3504
    %3555 = vmatprep.subr.mxu0 0.0
    %3556 = vmatpush1.msra.mxu0 %v3505
    %3557 = vmatprep.subr.mxu0 0.0
    %3558 = vmatpush1.msra.mxu0 %v3506
    %3559 = vmatprep.subr.mxu0 0.0
    %3560 = vmatpush1.msra.mxu0 %v3507
    %3561 = vmatprep.subr.mxu0 0.0
    %3562 = vmatpush1.msra.mxu0 %v3508
    %3563 = vmatprep.subr.mxu0 0.0
    %3564 = vmatpush1.msra.mxu0 %v3509
    %3565 = vmatprep.subr.mxu0 0.0
    %3566 = vmatpush1.msra.mxu0 %v3510
    %3567 = vmatprep.subr.mxu0 0.0
    %3568 = vmatpush1.msra.mxu0 %v3511
    %3569 = vmatprep.subr.mxu0 0.0
    %3570 = vmatpush1.msra.mxu0 %v3512
    %3571 = vmatprep.subr.mxu0 0.0
    %3572 = vmatpush1.msra.mxu0 %v3513
    %3573 = vmatprep.subr.mxu0 0.0
    %3574 = vmatpush1.msra.mxu0 %v3514
    %3575 = vmatprep.subr.mxu0 0.0
    %3576 = vmatpush1.msra.mxu0 %v3515
    %3577 = vmatprep.subr.mxu0 0.0
    %3578 = vmatpush1.msra.mxu0 %v3516
    %3579 = vmatprep.subr.mxu0 0.0
    %3580 = vmatpush1.msra.mxu0 %v3517
    %3581 = vmatprep.subr.mxu0 0.0
    %3582 = vmatpush1.msra.mxu0 %v3518
    %3583 = vmatprep.subr.mxu0 0.0
    %3584 = vmatpush1.msra.mxu0 %v3519
    %3585 = vmatprep.mubr.f32.mxu0 %v3487
    %3586 = vmatmul.mubr.f32.gmra.mrb[0].mxu0 %v3480
    %v3587 = vpop.f32.mrb[0].mxu0
    %v3588 = vadd.f32 %v3520, %v3587
    %v3589 = vpop.f32.mrb[0].mxu0
    %3590 = vdwg.mxu0
    %vm3591 = vcmask 16384
    %3592 = vst.msk [vmem:[#allocation3] sm:$0x1] %vm3591, %v3588
    // Predicated region
    $region50: #{_forward_and_reference.1} parent=1 // pred_check
      _
    $region51: #{_forward_and_reference.1} parent=1 // pred_check_branch
      %3594 = sbr.rel (0) target = $region53
    $region52: #{_forward_and_reference.1} parent=1 // pred_region
      %s3596 = ssub.s32 16, 16
      %3597 = vsyncadd [#allocation4], %s3596
      %s3599 = sshll.u32 [#allocation3], 4
      %s3600 = int_to_ptr.vmem [resolvable:$true] %s3599
      %3602 = dma.vmem_to_hbm [thread:$0]  %s3600, 16, %s12, [#allocation4]
    $region53: #{_forward_and_reference.1} parent=1 // pred_fallthru
      _
    // Predicated region
    $region54: #{_forward_and_reference.1} parent=1 // pred_check
      _
    $region55: #{_forward_and_reference.1} parent=1 // pred_check_branch
      %3604 = sbr.rel (0) target = $region57
    $region56: #{_forward_and_reference.1} parent=1 // pred_region
      %3605 = dma.done [#allocation4], 16
    $region57: #{_forward_and_reference.1} parent=1 // pred_fallthru
      _
    %3606 = vsyncpa [#allocation4], 1

</llo_original>
